<compile_context>
chip_gen: v7x
topology: tpu7x:2x2x1
jax: 0.10.0
libtpu: 0.0.40
codegen_flags: <defaults>
</compile_context>

<pallas_src>
import math

import jax
import jax.numpy as jnp
from jax import lax
from jax.experimental import pallas as pl
from jax.experimental.pallas import tpu as pltpu


def _physical_vmem_bytes():
    """Per-core VMEM capacity; conservative (v7x-sized) fallback if unknown."""
    try:
        info = pltpu.get_tpu_info()
        for attr in ("vmem_capacity_bytes", "vmem_bytes", "vmem_size_bytes"):
            val = getattr(info, attr, None)
            if val:
                return int(val)
    except Exception:
        pass
    return 64 * 1024 * 1024


def _vmem_estimate(S, D, H, dh, T, c_bytes, o_bytes):
    """Rough per-core VMEM working set for a given q/kv tile size T."""
    return (2 * S * D * c_bytes          # x block (double-buffered)
            + 2 * S * D * c_bytes        # K + V head-split scratch
            + 2 * 4 * D * D * c_bytes    # Wq / [Wk|Wv] / Wout (double-buffered)
            + 2 * T * D * o_bytes        # output block (double-buffered)
            + H * T * (dh + 2) * 4       # m / l / acc online-softmax scratch
            + 3 * H * T * T * 4          # (H, T, T) score-block temporaries
            + 2 * T * 3 * D * 4          # projection-chunk f32 temporaries
            + (2 << 20))                 # headroom


def _choose_tile(S, D, H, dh, c_bytes, o_bytes, vmem_budget, q_block):
    """Largest tile (multiple of 16, divides S, <= q_block) fitting the budget."""
    cands = {c for c in (512, 256, 128, 64, 32, 16)
             if c <= min(S, q_block) and S % c == 0}
    if S <= q_block or not cands:
        cands.add(S)
    for t in sorted(cands, reverse=True):
        if _vmem_estimate(S, D, H, dh, t, c_bytes, o_bytes) <= vmem_budget:
            return t
    return min(cands)


def _make_kernel(n_heads, d_heads, seq_len, tile, n_tiles, causal, compute_dtype):
    H, dh, S, T, NT = n_heads, d_heads, seq_len, tile, n_tiles
    D = H * dh
    exact = jnp.dtype(compute_dtype) == jnp.dtype(jnp.float32)

    def kernel(x_ref, wq_ref, wkv_ref, wo_ref, bq_ref, bkv_ref, bo_ref,
               o_ref, k_scr, v_scr, m_scr, l_scr, acc_scr):
        qi = pl.program_id(1)

        # ---- Fused K|V projection, once per batch element (first q-tile).
        #      Chunked over S so the f32 intermediate stays (T, 2D); heads are
        #      written into block-major scratch so the KV loop can index
        #      k_scr[kv] with a dynamic block id.
        @pl.when(qi == 0)
        def _project_kv():
            b_kv = bkv_ref[0]                                     # (2D,) f32
            for j in range(NT):                                   # static
                if NT == 1:
                    xj = x_ref[0]                                 # (S, D)
                else:
                    xj = x_ref.at[0][pl.ds(j * T, T), :]          # (T, D)
                kv = jnp.dot(xj, wkv_ref[...],
                             preferred_element_type=jnp.float32) + b_kv
                kvc = kv.astype(compute_dtype)                    # (T, 2D)
                # TODO(synk): pltpu.einshape('t(hd)->htd') repack instead of
                # the per-head slice loop.
                for h in range(H):                                # static
                    k_scr[j, h] = kvc[:, h * dh:(h + 1) * dh]
                    v_scr[j, h] = kvc[:, D + h * dh:D + (h + 1) * dh]

        # ---- Q projection for this query tile (1/sqrt(dh) folded into Wq). --
        q_start = pl.multiple_of(qi * T, T)
        if T == S:
            xq = x_ref[0]
        else:
            xq = x_ref.at[0][pl.ds(q_start, T), :]
        q = jnp.dot(xq, wq_ref[...],
                    preferred_element_type=jnp.float32) + bq_ref[0]
        qc = q.astype(compute_dtype)
        q3 = jnp.stack([qc[:, h * dh:(h + 1) * dh] for h in range(H)],
                       axis=0)                                     # (H, T, dh)

        # ---- Online-softmax loop over KV blocks.  For causal attention only
        #      blocks 0..qi are visited (fully-masked blocks are skipped).
        m_scr[...] = jnp.full(m_scr.shape, -jnp.inf, jnp.float32)
        l_scr[...] = jnp.zeros(l_scr.shape, jnp.float32)
        acc_scr[...] = jnp.zeros(acc_scr.shape, jnp.float32)

        kv_hi = (qi + 1) if causal else NT

        def _kv_step(kv, carry):
            kb = k_scr[kv]                                         # (H, T, dh)
            vb = v_scr[kv]
            s = jnp.einsum('hqd,hkd->hqk', q3, kb,
                           preferred_element_type=jnp.float32)     # (H, T, T)
            if causal:
                row = lax.broadcasted_iota(jnp.int32, (T, T), 0) + q_start
                col = lax.broadcasted_iota(jnp.int32, (T, T), 1) + kv * T
                s = jnp.where((col > row)[None, :, :], -jnp.inf, s)
            m_prev = m_scr[...]
            m_new = jnp.maximum(m_prev, jnp.max(s, axis=-1, keepdims=True))
            alpha = jnp.exp(m_prev - m_new)                        # (H, T, 1)
            # exp in the compute dtype: bf16 EUP path on v6e/v7x and no
            # separate f32->bf16 cast of the whole score block before PV.
            p = jnp.exp((s - m_new).astype(compute_dtype))         # (H, T, T)
            l_scr[...] = alpha * l_scr[...] + jnp.sum(
                p.astype(jnp.float32), axis=-1, keepdims=True)
            acc_scr[...] = alpha * acc_scr[...] + jnp.einsum(
                'hqk,hkd->hqd', p, vb,
                preferred_element_type=jnp.float32)                # (H, T, dh)
            m_scr[...] = m_new
            return carry

        lax.fori_loop(0, kv_hi, _kv_step, 0)

        # ---- Normalize, merge heads, out_proj. -----------------------------
        inv_l = pl.reciprocal(l_scr[...], approx=not exact)        # (H, T, 1)
        o3 = (acc_scr[...] * inv_l).astype(compute_dtype)          # (H, T, dh)
        # TODO(synk): pltpu.einshape('htd->t(hd)') merge instead of concat.
        attn = jnp.concatenate([o3[h] for h in range(H)], axis=-1)  # (T, D)
        y = jnp.dot(attn, wo_ref[...],
                    preferred_element_type=jnp.float32) + bo_ref[0]
        o_ref[0] = y.astype(o_ref.dtype)

    return kernel


def self_attention(x, w_in, b_in, w_out, b_out, *, n_heads,
                   causal_mask=False, compute_dtype=jnp.bfloat16,
                   q_block=256, out_dtype=None):
    B, S, D = x.shape
    assert D % n_heads == 0
    H = n_heads
    dh = D // H
    scale = 1.0 / math.sqrt(dh)
    out_dtype = x.dtype if out_dtype is None else jnp.dtype(out_dtype)

    # Host-side prep: split fused in_proj, pre-transpose to x @ W layout, fold
    # the attention scale into the Q projection, fuse K|V weights into one
    # (D, 2D) matrix, pre-cast weights AND x to the compute dtype.
    w_q, w_k, w_v = w_in[:D], w_in[D:2 * D], w_in[2 * D:]
    b_q, b_k, b_v = b_in[:D], b_in[D:2 * D], b_in[2 * D:]
    wq_t = (w_q * scale).T.astype(compute_dtype)                       # (D, D)
    wkv_t = jnp.concatenate([w_k.T, w_v.T], axis=1).astype(compute_dtype)  # (D, 2D)
    wo_t = w_out.T.astype(compute_dtype)                               # (D, D)
    bq = (b_q * scale).reshape(1, D).astype(jnp.float32)
    bkv = jnp.concatenate([b_k, b_v]).reshape(1, 2 * D).astype(jnp.float32)
    bo = b_out.reshape(1, D).astype(jnp.float32)
    xc = x.astype(compute_dtype)          # halves x DMA / VMEM block for bf16

    # Per-generation VMEM budget (v5e/v6e: 128 MiB physical, v7x: 64 MiB) and
    # q/kv tile choice.  On v5e passing q_block=128 matches the 128-wide MXU.
    c_bytes = jnp.dtype(compute_dtype).itemsize
    o_bytes = jnp.dtype(out_dtype).itemsize
    vmem_limit = max(32 * 1024 * 1024, int(_physical_vmem_bytes() * 0.85))
    T = _choose_tile(S, D, H, dh, c_bytes, o_bytes, vmem_limit, q_block)
    NT = S // T

    kernel = _make_kernel(H, dh, S, T, NT, causal_mask, compute_dtype)

    causal_frac = 0.55 if causal_mask else 1.0
    flops = int(2 * B * S * D * (3 * D)                 # in_proj
                + causal_frac * 4 * B * S * S * D       # QK^T + PV (all heads)
                + 2 * B * S * D * D)                    # out_proj
    transcendentals = int(causal_frac * B * H * S * S)
    bytes_accessed = int(B * S * D * (c_bytes + o_bytes)
                         + 4 * D * D * c_bytes + 4 * D * 4)

    const2 = lambda b, q: (0, 0)
    grid_spec = pltpu.PrefetchScalarGridSpec(
        num_scalar_prefetch=0,
        grid=(B, NT),
        in_specs=[
            pl.BlockSpec((1, S, D), lambda b, q: (b, 0, 0)),   # x (per batch)
            pl.BlockSpec((D, D), const2),                      # Wq^T (pre-scaled)
            pl.BlockSpec((D, 2 * D), const2),                  # [Wk^T | Wv^T]
            pl.BlockSpec((D, D), const2),                      # Wout^T
            pl.BlockSpec((1, D), const2),                      # bq (pre-scaled)
            pl.BlockSpec((1, 2 * D), const2),                  # [bk | bv]
            pl.BlockSpec((1, D), const2),                      # bout
        ],
        out_specs=pl.BlockSpec((1, T, D), lambda b, q: (b, q, 0)),
        scratch_shapes=[
            pltpu.VMEM((NT, H, T, dh), compute_dtype),   # K: (kv block, head, T, dh)
            pltpu.VMEM((NT, H, T, dh), compute_dtype),   # V
            pltpu.VMEM((H, T, 1), jnp.float32),          # running row max
            pltpu.VMEM((H, T, 1), jnp.float32),          # running denominator
            pltpu.VMEM((H, T, dh), jnp.float32),         # running numerator
        ],
    )

    return pl.pallas_call(
        kernel,
        out_shape=jax.ShapeDtypeStruct((B, S, D), out_dtype),
        grid_spec=grid_spec,
        compiler_params=pltpu.CompilerParams(
            dimension_semantics=("parallel", "arbitrary"),
            vmem_limit_bytes=vmem_limit),
        cost_estimate=pl.CostEstimate(
            flops=flops, transcendentals=transcendentals,
            bytes_accessed=bytes_accessed),
    )(xc, wq_t, wkv_t, wo_t, bq, bkv, bo)


def self_attention_ref(x, w_in, b_in, w_out, b_out, *, n_heads,
                       causal_mask=False):
    """Plain-JAX reference mirroring the PyTorch forward exactly."""
    B, S, D = x.shape
    dh = D // n_heads
    qkv = x @ w_in.T + b_in                              # (B, S, 3D)
    q, k, v = jnp.split(qkv, 3, axis=-1)

    def heads(t):
        return t.reshape(B, S, n_heads, dh).transpose(0, 2, 1, 3)

    q, k, v = heads(q), heads(k), heads(v)               # (B, H, S, dh)
    w = q @ k.transpose(0, 1, 3, 2)                      # (B, H, S, S)
    if causal_mask:
        mask = jnp.triu(jnp.ones((S, S), dtype=bool), 1)
        w = jnp.where(mask, -jnp.inf, w)
    w = w / math.sqrt(dh)
    w = jax.nn.softmax(w, axis=-1)
    out = w @ v                                          # (B, H, S, dh)
    out = out.transpose(0, 2, 1, 3).reshape(B, S, D)
    return out @ w_out.T + b_out


def _run_case(B, S, D, H, q_block, causal, compute_dtype, tol):
    key = jax.random.PRNGKey(0)
    kx, kwi, kbi, kwo, kbo = jax.random.split(key, 5)
    x = jax.random.normal(kx, (B, S, D), dtype=jnp.float32)
    w_in = jax.random.normal(kwi, (3 * D, D), dtype=jnp.float32) * 0.05
    b_in = jax.random.normal(kbi, (3 * D,), dtype=jnp.float32) * 0.05
    w_out = jax.random.normal(kwo, (D, D), dtype=jnp.float32) * 0.05
    b_out = jax.random.normal(kbo, (D,), dtype=jnp.float32) * 0.05

    ref = self_attention_ref(x, w_in, b_in, w_out, b_out,
                             n_heads=H, causal_mask=causal)
    out = self_attention(x, w_in, b_in, w_out, b_out, n_heads=H,
                         causal_mask=causal, compute_dtype=compute_dtype,
                         q_block=q_block)
    out = jax.block_until_ready(out).astype(jnp.float32)
    assert jnp.allclose(out, ref, atol=tol, rtol=tol), (
        f"mismatch: S={S} causal={causal} dtype={compute_dtype} "
        f"max_err={jnp.max(jnp.abs(out - ref))}")


if __name__ == "__main__":
    # Small single-tile shapes (batch=2, seq=8, d_embed=32, 4 heads).
    for causal in (False, True):
        _run_case(2, 8, 32, 4, 256, causal, jnp.float32, 2e-3)   # tight parity
        _run_case(2, 8, 32, 4, 256, causal, jnp.bfloat16, 3e-2)  # default path
    # Multi-tile path: 4 q/kv tiles of 16 rows exercising the online-softmax
    # KV loop, the causal block-skip bound and per-batch K/V scratch reuse.
    for causal in (False, True):
        _run_case(2, 64, 32, 4, 16, causal, jnp.float32, 2e-3)
    _run_case(2, 64, 32, 4, 16, True, jnp.bfloat16, 3e-2)
    print("KERNEL_OK")
</pallas_src>

<mosaic_0001>
module attributes {stable_mosaic.version = 11 : i64} {
  func.func @kernel(%arg0: i32, %arg1: i32, %arg2: memref<1x8x32xf32, #tpu.memory_space<vmem>>, %arg3: memref<32x32xf32, #tpu.memory_space<vmem>>, %arg4: memref<32x64xf32, #tpu.memory_space<vmem>>, %arg5: memref<32x32xf32, #tpu.memory_space<vmem>>, %arg6: memref<1x32xf32, #tpu.memory_space<vmem>>, %arg7: memref<1x64xf32, #tpu.memory_space<vmem>>, %arg8: memref<1x32xf32, #tpu.memory_space<vmem>>, %arg9: memref<1x8x32xf32, #tpu.memory_space<vmem>>, %arg10: memref<1x4x8x8xf32, #tpu.memory_space<vmem>>, %arg11: memref<1x4x8x8xf32, #tpu.memory_space<vmem>>, %arg12: memref<4x8x1xf32, #tpu.memory_space<vmem>>, %arg13: memref<4x8x1xf32, #tpu.memory_space<vmem>>, %arg14: memref<4x8x8xf32, #tpu.memory_space<vmem>>) attributes {dimension_semantics = [#tpu.dimension_semantics<parallel>, #tpu.dimension_semantics<arbitrary>], iteration_bounds = array<i64: 2, 1>, scalar_prefetch = 0 : i64, scratch_operands = 5 : i64, tpu.core_type = #tpu.core_type<tc>, window_params = [{transform_indices = @transform_0, window_bounds = array<i64: 1, 8, 32>}, {pipeline_mode = #tpu.pipeline_mode<synchronous>, transform_indices = @transform_1, window_bounds = array<i64: 32, 32>}, {pipeline_mode = #tpu.pipeline_mode<synchronous>, transform_indices = @transform_2, window_bounds = array<i64: 32, 64>}, {pipeline_mode = #tpu.pipeline_mode<synchronous>, transform_indices = @transform_3, window_bounds = array<i64: 32, 32>}, {pipeline_mode = #tpu.pipeline_mode<synchronous>, transform_indices = @transform_4, window_bounds = array<i64: 1, 32>}, {pipeline_mode = #tpu.pipeline_mode<synchronous>, transform_indices = @transform_5, window_bounds = array<i64: 1, 64>}, {pipeline_mode = #tpu.pipeline_mode<synchronous>, transform_indices = @transform_6, window_bounds = array<i64: 1, 32>}, {transform_indices = @transform_7, window_bounds = array<i64: 1, 8, 32>}]} {
    %c0_i32 = arith.constant 0 : i32
    %0 = arith.cmpi eq, %arg1, %c0_i32 : i32
    %1 = arith.extui %0 : i1 to i32
    %c0_i32_0 = arith.constant 0 : i32
    %2 = arith.cmpi ne, %1, %c0_i32_0 : i32
    scf.if %2 {
      %c0_62 = arith.constant 0 : index
      %c0_63 = arith.constant 0 : index
      %80 = vector.load %arg7[%c0_62, %c0_63] : memref<1x64xf32, #tpu.memory_space<vmem>>, vector<1x64xf32>
      %81 = vector.shape_cast %80 : vector<1x64xf32> to vector<64xf32>
      %c0_64 = arith.constant 0 : index
      %c0_65 = arith.constant 0 : index
      %c0_66 = arith.constant 0 : index
      %82 = vector.load %arg2[%c0_64, %c0_65, %c0_66] : memref<1x8x32xf32, #tpu.memory_space<vmem>>, vector<1x8x32xf32>
      %83 = vector.shape_cast %82 : vector<1x8x32xf32> to vector<8x32xf32>
      %c0_67 = arith.constant 0 : index
      %c0_68 = arith.constant 0 : index
      %84 = vector.load %arg4[%c0_67, %c0_68] : memref<32x64xf32, #tpu.memory_space<vmem>>, vector<32x64xf32>
      %cst_69 = arith.constant dense<0.000000e+00> : vector<8x64xf32>
      %85 = tpu.matmul %83, %84, %cst_69 {dimension_numbers = #tpu.dot_dimension_numbers<[1], [0], [0], [1], [0, 0, 1, 1], [], []>} : vector<8x32xf32>, vector<32x64xf32>, vector<8x64xf32> -> vector<8x64xf32>
      %86 = vector.shape_cast %81 : vector<64xf32> to vector<1x64xf32>
      %87 = vector.broadcast %86 : vector<1x64xf32> to vector<8x64xf32>
      %88 = arith.addf %85, %87 : vector<8x64xf32>
      %89 = vector.extract_strided_slice %88 {offsets = [0, 0], sizes = [8, 8], strides = [1, 1]} : vector<8x64xf32> to vector<8x8xf32>
      %c0_70 = arith.constant 0 : index
      %c0_71 = arith.constant 0 : index
      %c0_72 = arith.constant 0 : index
      %c0_73 = arith.constant 0 : index
      %90 = vector.load %arg10[%c0_70, %c0_71, %c0_72, %c0_73] : memref<1x4x8x8xf32, #tpu.memory_space<vmem>>, vector<1x1x8x8xf32>
      %91 = vector.shape_cast %90 : vector<1x1x8x8xf32> to vector<8x8xf32>
      %92 = vector.shape_cast %89 : vector<8x8xf32> to vector<1x1x8x8xf32>
      tpu.vector_store %arg10[%c0_70, %c0_71, %c0_72, %c0_73], %92 {strides = array<i32>} : memref<1x4x8x8xf32, #tpu.memory_space<vmem>>, vector<1x1x8x8xf32>,
      %93 = vector.extract_strided_slice %88 {offsets = [0, 32], sizes = [8, 8], strides = [1, 1]} : vector<8x64xf32> to vector<8x8xf32>
      %c0_74 = arith.constant 0 : index
      %c0_75 = arith.constant 0 : index
      %c0_76 = arith.constant 0 : index
      %c0_77 = arith.constant 0 : index
      %94 = vector.load %arg11[%c0_74, %c0_75, %c0_76, %c0_77] : memref<1x4x8x8xf32, #tpu.memory_space<vmem>>, vector<1x1x8x8xf32>
      %95 = vector.shape_cast %94 : vector<1x1x8x8xf32> to vector<8x8xf32>
      %96 = vector.shape_cast %93 : vector<8x8xf32> to vector<1x1x8x8xf32>
      tpu.vector_store %arg11[%c0_74, %c0_75, %c0_76, %c0_77], %96 {strides = array<i32>} : memref<1x4x8x8xf32, #tpu.memory_space<vmem>>, vector<1x1x8x8xf32>,
      %97 = vector.extract_strided_slice %88 {offsets = [0, 8], sizes = [8, 8], strides = [1, 1]} : vector<8x64xf32> to vector<8x8xf32>
      %c0_78 = arith.constant 0 : index
      %c1 = arith.constant 1 : index
      %c0_79 = arith.constant 0 : index
      %c0_80 = arith.constant 0 : index
      %98 = vector.load %arg10[%c0_78, %c1, %c0_79, %c0_80] : memref<1x4x8x8xf32, #tpu.memory_space<vmem>>, vector<1x1x8x8xf32>
      %99 = vector.shape_cast %98 : vector<1x1x8x8xf32> to vector<8x8xf32>
      %100 = vector.shape_cast %97 : vector<8x8xf32> to vector<1x1x8x8xf32>
      tpu.vector_store %arg10[%c0_78, %c1, %c0_79, %c0_80], %100 {strides = array<i32>} : memref<1x4x8x8xf32, #tpu.memory_space<vmem>>, vector<1x1x8x8xf32>,
      %101 = vector.extract_strided_slice %88 {offsets = [0, 40], sizes = [8, 8], strides = [1, 1]} : vector<8x64xf32> to vector<8x8xf32>
      %c0_81 = arith.constant 0 : index
      %c1_82 = arith.constant 1 : index
      %c0_83 = arith.constant 0 : index
      %c0_84 = arith.constant 0 : index
      %102 = vector.load %arg11[%c0_81, %c1_82, %c0_83, %c0_84] : memref<1x4x8x8xf32, #tpu.memory_space<vmem>>, vector<1x1x8x8xf32>
      %103 = vector.shape_cast %102 : vector<1x1x8x8xf32> to vector<8x8xf32>
      %104 = vector.shape_cast %101 : vector<8x8xf32> to vector<1x1x8x8xf32>
      tpu.vector_store %arg11[%c0_81, %c1_82, %c0_83, %c0_84], %104 {strides = array<i32>} : memref<1x4x8x8xf32, #tpu.memory_space<vmem>>, vector<1x1x8x8xf32>,
      %105 = vector.extract_strided_slice %88 {offsets = [0, 16], sizes = [8, 8], strides = [1, 1]} : vector<8x64xf32> to vector<8x8xf32>
      %c0_85 = arith.constant 0 : index
      %c2 = arith.constant 2 : index
      %c0_86 = arith.constant 0 : index
      %c0_87 = arith.constant 0 : index
      %106 = vector.load %arg10[%c0_85, %c2, %c0_86, %c0_87] : memref<1x4x8x8xf32, #tpu.memory_space<vmem>>, vector<1x1x8x8xf32>
      %107 = vector.shape_cast %106 : vector<1x1x8x8xf32> to vector<8x8xf32>
      %108 = vector.shape_cast %105 : vector<8x8xf32> to vector<1x1x8x8xf32>
      tpu.vector_store %arg10[%c0_85, %c2, %c0_86, %c0_87], %108 {strides = array<i32>} : memref<1x4x8x8xf32, #tpu.memory_space<vmem>>, vector<1x1x8x8xf32>,
      %109 = vector.extract_strided_slice %88 {offsets = [0, 48], sizes = [8, 8], strides = [1, 1]} : vector<8x64xf32> to vector<8x8xf32>
      %c0_88 = arith.constant 0 : index
      %c2_89 = arith.constant 2 : index
      %c0_90 = arith.constant 0 : index
      %c0_91 = arith.constant 0 : index
      %110 = vector.load %arg11[%c0_88, %c2_89, %c0_90, %c0_91] : memref<1x4x8x8xf32, #tpu.memory_space<vmem>>, vector<1x1x8x8xf32>
      %111 = vector.shape_cast %110 : vector<1x1x8x8xf32> to vector<8x8xf32>
      %112 = vector.shape_cast %109 : vector<8x8xf32> to vector<1x1x8x8xf32>
      tpu.vector_store %arg11[%c0_88, %c2_89, %c0_90, %c0_91], %112 {strides = array<i32>} : memref<1x4x8x8xf32, #tpu.memory_space<vmem>>, vector<1x1x8x8xf32>,
      %113 = vector.extract_strided_slice %88 {offsets = [0, 24], sizes = [8, 8], strides = [1, 1]} : vector<8x64xf32> to vector<8x8xf32>
      %c0_92 = arith.constant 0 : index
      %c3 = arith.constant 3 : index
      %c0_93 = arith.constant 0 : index
      %c0_94 = arith.constant 0 : index
      %114 = vector.load %arg10[%c0_92, %c3, %c0_93, %c0_94] : memref<1x4x8x8xf32, #tpu.memory_space<vmem>>, vector<1x1x8x8xf32>
      %115 = vector.shape_cast %114 : vector<1x1x8x8xf32> to vector<8x8xf32>
      %116 = vector.shape_cast %113 : vector<8x8xf32> to vector<1x1x8x8xf32>
      tpu.vector_store %arg10[%c0_92, %c3, %c0_93, %c0_94], %116 {strides = array<i32>} : memref<1x4x8x8xf32, #tpu.memory_space<vmem>>, vector<1x1x8x8xf32>,
      %117 = vector.extract_strided_slice %88 {offsets = [0, 56], sizes = [8, 8], strides = [1, 1]} : vector<8x64xf32> to vector<8x8xf32>
      %c0_95 = arith.constant 0 : index
      %c3_96 = arith.constant 3 : index
      %c0_97 = arith.constant 0 : index
      %c0_98 = arith.constant 0 : index
      %118 = vector.load %arg11[%c0_95, %c3_96, %c0_97, %c0_98] : memref<1x4x8x8xf32, #tpu.memory_space<vmem>>, vector<1x1x8x8xf32>
      %119 = vector.shape_cast %118 : vector<1x1x8x8xf32> to vector<8x8xf32>
      %120 = vector.shape_cast %117 : vector<8x8xf32> to vector<1x1x8x8xf32>
      tpu.vector_store %arg11[%c0_95, %c3_96, %c0_97, %c0_98], %120 {strides = array<i32>} : memref<1x4x8x8xf32, #tpu.memory_space<vmem>>, vector<1x1x8x8xf32>,
    } else {
    }
    %c0 = arith.constant 0 : index
    %c0_1 = arith.constant 0 : index
    %c0_2 = arith.constant 0 : index
    %3 = vector.load %arg2[%c0, %c0_1, %c0_2] : memref<1x8x32xf32, #tpu.memory_space<vmem>>, vector<1x8x32xf32>
    %4 = vector.shape_cast %3 : vector<1x8x32xf32> to vector<8x32xf32>
    %c0_3 = arith.constant 0 : index
    %c0_4 = arith.constant 0 : index
    %5 = vector.load %arg3[%c0_3, %c0_4] : memref<32x32xf32, #tpu.memory_space<vmem>>, vector<32x32xf32>
    %cst = arith.constant dense<0.000000e+00> : vector<8x32xf32>
    %6 = tpu.matmul %4, %5, %cst {dimension_numbers = #tpu.dot_dimension_numbers<[1], [0], [0], [1], [0, 0, 1, 1], [], []>} : vector<8x32xf32>, vector<32x32xf32>, vector<8x32xf32> -> vector<8x32xf32>
    %c0_5 = arith.constant 0 : index
    %c0_6 = arith.constant 0 : index
    %7 = vector.load %arg6[%c0_5, %c0_6] : memref<1x32xf32, #tpu.memory_space<vmem>>, vector<1x32xf32>
    %8 = vector.shape_cast %7 : vector<1x32xf32> to vector<32xf32>
    %9 = vector.shape_cast %8 : vector<32xf32> to vector<1x32xf32>
    %10 = vector.broadcast %9 : vector<1x32xf32> to vector<8x32xf32>
    %11 = arith.addf %6, %10 : vector<8x32xf32>
    %12 = vector.extract_strided_slice %11 {offsets = [0, 0], sizes = [8, 8], strides = [1, 1]} : vector<8x32xf32> to vector<8x8xf32>
    %13 = vector.extract_strided_slice %11 {offsets = [0, 8], sizes = [8, 8], strides = [1, 1]} : vector<8x32xf32> to vector<8x8xf32>
    %14 = vector.extract_strided_slice %11 {offsets = [0, 16], sizes = [8, 8], strides = [1, 1]} : vector<8x32xf32> to vector<8x8xf32>
    %15 = vector.extract_strided_slice %11 {offsets = [0, 24], sizes = [8, 8], strides = [1, 1]} : vector<8x32xf32> to vector<8x8xf32>
    %16 = vector.shape_cast %12 : vector<8x8xf32> to vector<1x8x8xf32>
    %17 = vector.shape_cast %13 : vector<8x8xf32> to vector<1x8x8xf32>
    %18 = vector.shape_cast %14 : vector<8x8xf32> to vector<1x8x8xf32>
    %19 = vector.shape_cast %15 : vector<8x8xf32> to vector<1x8x8xf32>
    %20 = tpu.concatenate %16, %17, %18, %19 in 0 : vector<1x8x8xf32>, vector<1x8x8xf32>, vector<1x8x8xf32>, vector<1x8x8xf32> -> vector<4x8x8xf32>
    %cst_7 = arith.constant 0xFF800000 : f32
    %21 = vector.broadcast %cst_7 : f32 to vector<4x8x1xf32>
    %c0_8 = arith.constant 0 : index
    %c0_9 = arith.constant 0 : index
    %c0_10 = arith.constant 0 : index
    %22 = vector.load %arg12[%c0_8, %c0_9, %c0_10] : memref<4x8x1xf32, #tpu.memory_space<vmem>>, vector<4x8x1xf32>
    tpu.vector_store %arg12[%c0_8, %c0_9, %c0_10], %21 {strides = array<i32>} : memref<4x8x1xf32, #tpu.memory_space<vmem>>, vector<4x8x1xf32>,
    %cst_11 = arith.constant 0.000000e+00 : f32
    %23 = vector.broadcast %cst_11 : f32 to vector<4x8x1xf32>
    %c0_12 = arith.constant 0 : index
    %c0_13 = arith.constant 0 : index
    %c0_14 = arith.constant 0 : index
    %24 = vector.load %arg13[%c0_12, %c0_13, %c0_14] : memref<4x8x1xf32, #tpu.memory_space<vmem>>, vector<4x8x1xf32>
    tpu.vector_store %arg13[%c0_12, %c0_13, %c0_14], %23 {strides = array<i32>} : memref<4x8x1xf32, #tpu.memory_space<vmem>>, vector<4x8x1xf32>,
    %cst_15 = arith.constant 0.000000e+00 : f32
    %25 = vector.broadcast %cst_15 : f32 to vector<4x8x8xf32>
    %c0_16 = arith.constant 0 : index
    %c0_17 = arith.constant 0 : index
    %c0_18 = arith.constant 0 : index
    %26 = vector.load %arg14[%c0_16, %c0_17, %c0_18] : memref<4x8x8xf32, #tpu.memory_space<vmem>>, vector<4x8x8xf32>
    tpu.vector_store %arg14[%c0_16, %c0_17, %c0_18], %25 {strides = array<i32>} : memref<4x8x8xf32, #tpu.memory_space<vmem>>, vector<4x8x8xf32>,
    %c0_i32_19 = arith.constant 0 : i32
    %27 = arith.index_cast %c0_i32_19 : i32 to index
    %c0_20 = arith.constant 0 : index
    %c0_21 = arith.constant 0 : index
    %c0_22 = arith.constant 0 : index
    %28 = vector.load %arg10[%27, %c0_20, %c0_21, %c0_22] : memref<1x4x8x8xf32, #tpu.memory_space<vmem>>, vector<1x4x8x8xf32>
    %29 = vector.shape_cast %28 : vector<1x4x8x8xf32> to vector<4x8x8xf32>
    %30 = arith.index_cast %c0_i32_19 : i32 to index
    %c0_23 = arith.constant 0 : index
    %c0_24 = arith.constant 0 : index
    %c0_25 = arith.constant 0 : index
    %31 = vector.load %arg11[%30, %c0_23, %c0_24, %c0_25] : memref<1x4x8x8xf32, #tpu.memory_space<vmem>>, vector<1x4x8x8xf32>
    %32 = vector.shape_cast %31 : vector<1x4x8x8xf32> to vector<4x8x8xf32>
    "tpu.trace_start"() <{level = 10 : i32, message = "hqd,hkd->hqk"}> : () -> ()
    %cst_26 = arith.constant dense<0.000000e+00> : vector<4x8x8xf32>
    %33 = tpu.matmul %20, %29, %cst_26 {dimension_numbers = #tpu.dot_dimension_numbers<[2], [2], [1], [1], [0, 0, 0, 1, 1, 1], [0], [0]>} : vector<4x8x8xf32>, vector<4x8x8xf32>, vector<4x8x8xf32> -> vector<4x8x8xf32>
    "tpu.trace_stop"() : () -> ()
    %c0_27 = arith.constant 0 : index
    %c0_28 = arith.constant 0 : index
    %c0_29 = arith.constant 0 : index
    %34 = vector.load %arg12[%c0_27, %c0_28, %c0_29] : memref<4x8x1xf32, #tpu.memory_space<vmem>>, vector<4x8x1xf32>
    %cst_30 = arith.constant dense<0xFF800000> : vector<4x8xf32>
    %35 = vector.multi_reduction <maximumf>, %33, %cst_30 [2] : vector<4x8x8xf32> to vector<4x8xf32>
    %36 = vector.shape_cast %35 : vector<4x8xf32> to vector<4x8x1xf32>
    %37 = arith.maximumf %34, %36 : vector<4x8x1xf32>
    %38 = arith.subf %34, %37 : vector<4x8x1xf32>
    %39 = math.exp %38 : vector<4x8x1xf32>
    %40 = vector.broadcast %37 : vector<4x8x1xf32> to vector<4x8x8xf32>
    %41 = arith.subf %33, %40 : vector<4x8x8xf32>
    %42 = math.exp %41 : vector<4x8x8xf32>
    %c0_31 = arith.constant 0 : index
    %c0_32 = arith.constant 0 : index
    %c0_33 = arith.constant 0 : index
    %43 = vector.load %arg13[%c0_31, %c0_32, %c0_33] : memref<4x8x1xf32, #tpu.memory_space<vmem>>, vector<4x8x1xf32>
    %44 = arith.mulf %39, %43 : vector<4x8x1xf32>
    %cst_34 = arith.constant dense<0.000000e+00> : vector<4x8xf32>
    %45 = vector.multi_reduction <add>, %42, %cst_34 [2] : vector<4x8x8xf32> to vector<4x8xf32>
    %46 = vector.shape_cast %45 : vector<4x8xf32> to vector<4x8x1xf32>
    %47 = arith.addf %44, %46 : vector<4x8x1xf32>
    %c0_35 = arith.constant 0 : index
    %c0_36 = arith.constant 0 : index
    %c0_37 = arith.constant 0 : index
    %48 = vector.load %arg13[%c0_35, %c0_36, %c0_37] : memref<4x8x1xf32, #tpu.memory_space<vmem>>, vector<4x8x1xf32>
    tpu.vector_store %arg13[%c0_35, %c0_36, %c0_37], %47 {strides = array<i32>} : memref<4x8x1xf32, #tpu.memory_space<vmem>>, vector<4x8x1xf32>,
    %c0_38 = arith.constant 0 : index
    %c0_39 = arith.constant 0 : index
    %c0_40 = arith.constant 0 : index
    %49 = vector.load %arg14[%c0_38, %c0_39, %c0_40] : memref<4x8x8xf32, #tpu.memory_space<vmem>>, vector<4x8x8xf32>
    %50 = vector.broadcast %39 : vector<4x8x1xf32> to vector<4x8x8xf32>
    %51 = arith.mulf %50, %49 : vector<4x8x8xf32>
    "tpu.trace_start"() <{level = 10 : i32, message = "hqk,hkd->hqd"}> : () -> ()
    %cst_41 = arith.constant dense<0.000000e+00> : vector<4x8x8xf32>
    %52 = tpu.matmul %42, %32, %cst_41 {dimension_numbers = #tpu.dot_dimension_numbers<[2], [1], [1], [2], [0, 0, 0, 1, 1, 2], [0], [0]>} : vector<4x8x8xf32>, vector<4x8x8xf32>, vector<4x8x8xf32> -> vector<4x8x8xf32>
    "tpu.trace_stop"() : () -> ()
    %53 = arith.addf %51, %52 : vector<4x8x8xf32>
    %c0_42 = arith.constant 0 : index
    %c0_43 = arith.constant 0 : index
    %c0_44 = arith.constant 0 : index
    %54 = vector.load %arg14[%c0_42, %c0_43, %c0_44] : memref<4x8x8xf32, #tpu.memory_space<vmem>>, vector<4x8x8xf32>
    tpu.vector_store %arg14[%c0_42, %c0_43, %c0_44], %53 {strides = array<i32>} : memref<4x8x8xf32, #tpu.memory_space<vmem>>, vector<4x8x8xf32>,
    %c0_45 = arith.constant 0 : index
    %c0_46 = arith.constant 0 : index
    %c0_47 = arith.constant 0 : index
    %55 = vector.load %arg12[%c0_45, %c0_46, %c0_47] : memref<4x8x1xf32, #tpu.memory_space<vmem>>, vector<4x8x1xf32>
    tpu.vector_store %arg12[%c0_45, %c0_46, %c0_47], %37 {strides = array<i32>} : memref<4x8x1xf32, #tpu.memory_space<vmem>>, vector<4x8x1xf32>,
    %c1_i32 = arith.constant 1 : i32
    %c0_48 = arith.constant 0 : index
    %c0_49 = arith.constant 0 : index
    %c0_50 = arith.constant 0 : index
    %56 = vector.load %arg13[%c0_48, %c0_49, %c0_50] : memref<4x8x1xf32, #tpu.memory_space<vmem>>, vector<4x8x1xf32>
    %57 = tpu.reciprocal %56 : vector<4x8x1xf32> -> vector<4x8x1xf32>
    %c0_51 = arith.constant 0 : index
    %c0_52 = arith.constant 0 : index
    %c0_53 = arith.constant 0 : index
    %58 = vector.load %arg14[%c0_51, %c0_52, %c0_53] : memref<4x8x8xf32, #tpu.memory_space<vmem>>, vector<4x8x8xf32>
    %59 = vector.broadcast %57 : vector<4x8x1xf32> to vector<4x8x8xf32>
    %60 = arith.mulf %58, %59 : vector<4x8x8xf32>
    %61 = vector.extract_strided_slice %60 {offsets = [0, 0, 0], sizes = [1, 8, 8], strides = [1, 1, 1]} : vector<4x8x8xf32> to vector<1x8x8xf32>
    %62 = vector.shape_cast %61 : vector<1x8x8xf32> to vector<8x8xf32>
    %63 = vector.extract_strided_slice %60 {offsets = [1, 0, 0], sizes = [1, 8, 8], strides = [1, 1, 1]} : vector<4x8x8xf32> to vector<1x8x8xf32>
    %64 = vector.shape_cast %63 : vector<1x8x8xf32> to vector<8x8xf32>
    %65 = vector.extract_strided_slice %60 {offsets = [2, 0, 0], sizes = [1, 8, 8], strides = [1, 1, 1]} : vector<4x8x8xf32> to vector<1x8x8xf32>
    %66 = vector.shape_cast %65 : vector<1x8x8xf32> to vector<8x8xf32>
    %67 = vector.extract_strided_slice %60 {offsets = [3, 0, 0], sizes = [1, 8, 8], strides = [1, 1, 1]} : vector<4x8x8xf32> to vector<1x8x8xf32>
    %68 = vector.shape_cast %67 : vector<1x8x8xf32> to vector<8x8xf32>
    %69 = tpu.concatenate %62, %64, %66, %68 in 1 : vector<8x8xf32>, vector<8x8xf32>, vector<8x8xf32>, vector<8x8xf32> -> vector<8x32xf32>
    %c0_54 = arith.constant 0 : index
    %c0_55 = arith.constant 0 : index
    %70 = vector.load %arg5[%c0_54, %c0_55] : memref<32x32xf32, #tpu.memory_space<vmem>>, vector<32x32xf32>
    %cst_56 = arith.constant dense<0.000000e+00> : vector<8x32xf32>
    %71 = tpu.matmul %69, %70, %cst_56 {dimension_numbers = #tpu.dot_dimension_numbers<[1], [0], [0], [1], [0, 0, 1, 1], [], []>} : vector<8x32xf32>, vector<32x32xf32>, vector<8x32xf32> -> vector<8x32xf32>
    %c0_57 = arith.constant 0 : index
    %c0_58 = arith.constant 0 : index
    %72 = vector.load %arg8[%c0_57, %c0_58] : memref<1x32xf32, #tpu.memory_space<vmem>>, vector<1x32xf32>
    %73 = vector.shape_cast %72 : vector<1x32xf32> to vector<32xf32>
    %74 = vector.shape_cast %73 : vector<32xf32> to vector<1x32xf32>
    %75 = vector.broadcast %74 : vector<1x32xf32> to vector<8x32xf32>
    %76 = arith.addf %71, %75 : vector<8x32xf32>
    %c0_59 = arith.constant 0 : index
    %c0_60 = arith.constant 0 : index
    %c0_61 = arith.constant 0 : index
    %77 = vector.load %arg9[%c0_59, %c0_60, %c0_61] : memref<1x8x32xf32, #tpu.memory_space<vmem>>, vector<1x8x32xf32>
    %78 = vector.shape_cast %77 : vector<1x8x32xf32> to vector<8x32xf32>
    %79 = vector.shape_cast %76 : vector<8x32xf32> to vector<1x8x32xf32>
    tpu.vector_store %arg9[%c0_59, %c0_60, %c0_61], %79 {strides = array<i32>} : memref<1x8x32xf32, #tpu.memory_space<vmem>>, vector<1x8x32xf32>,
    return
  }
  func.func @transform_0(%arg0: i32, %arg1: i32) -> (i32, i32, i32) {
    %c0_i32 = arith.constant 0 : i32
    %c0_i32_0 = arith.constant 0 : i32
    %c0_i32_1 = arith.constant 0 : i32
    return %arg0, %c0_i32, %c0_i32_0 : i32, i32, i32
  }
  func.func @transform_1(%arg0: i32, %arg1: i32) -> (i32, i32) {
    %c0_i32 = arith.constant 0 : i32
    %c0_i32_0 = arith.constant 0 : i32
    %c0_i32_1 = arith.constant 0 : i32
    return %c0_i32, %c0_i32_0 : i32, i32
  }
  func.func @transform_2(%arg0: i32, %arg1: i32) -> (i32, i32) {
    %c0_i32 = arith.constant 0 : i32
    %c0_i32_0 = arith.constant 0 : i32
    %c0_i32_1 = arith.constant 0 : i32
    return %c0_i32, %c0_i32_0 : i32, i32
  }
  func.func @transform_3(%arg0: i32, %arg1: i32) -> (i32, i32) {
    %c0_i32 = arith.constant 0 : i32
    %c0_i32_0 = arith.constant 0 : i32
    %c0_i32_1 = arith.constant 0 : i32
    return %c0_i32, %c0_i32_0 : i32, i32
  }
  func.func @transform_4(%arg0: i32, %arg1: i32) -> (i32, i32) {
    %c0_i32 = arith.constant 0 : i32
    %c0_i32_0 = arith.constant 0 : i32
    %c0_i32_1 = arith.constant 0 : i32
    return %c0_i32, %c0_i32_0 : i32, i32
  }
  func.func @transform_5(%arg0: i32, %arg1: i32) -> (i32, i32) {
    %c0_i32 = arith.constant 0 : i32
    %c0_i32_0 = arith.constant 0 : i32
    %c0_i32_1 = arith.constant 0 : i32
    return %c0_i32, %c0_i32_0 : i32, i32
  }
  func.func @transform_6(%arg0: i32, %arg1: i32) -> (i32, i32) {
    %c0_i32 = arith.constant 0 : i32
    %c0_i32_0 = arith.constant 0 : i32
    %c0_i32_1 = arith.constant 0 : i32
    return %c0_i32, %c0_i32_0 : i32, i32
  }
  func.func @transform_7(%arg0: i32, %arg1: i32) -> (i32, i32, i32) {
    %c0_i32 = arith.constant 0 : i32
    %c0_i32_0 = arith.constant 0 : i32
    return %arg0, %arg1, %c0_i32 : i32, i32, i32
  }
}

</mosaic_0001>

<llo_original>
// kernel: tpu_custom_call.1
$region0: #{tpu_custom_call.1}
  #allocation0 [shape = 'u32[]', space=smem, size = 0x4, offset = 0x4, fixed_abs, tag = 'smem constant byte address 0x4 - core index']
  #allocation1 [shape = 'u32[144,128]{1,0:T(1,128)}', space=vmem, size = 0x12000, scoped, tag = 'internal scratch']
  #allocation2 [shape = 'f32[1,4,8,8]{3,2,1,0:T(8,128)}', space=vmem, size = 0x4000, scoped, tag = 'scratch operand']
  #allocation3 [shape = 'f32[1,4,8,8]{3,2,1,0:T(8,128)}', space=vmem, size = 0x4000, scoped, tag = 'scratch operand']
  #allocation4 [shape = 'f32[4,8,1]{2,1,0:T(8,128)}', space=vmem, size = 0x4000, scoped, tag = 'scratch operand']
  #allocation5 [shape = 'f32[4,8,1]{2,1,0:T(8,128)}', space=vmem, size = 0x4000, scoped, tag = 'scratch operand']
  #allocation6 [shape = 'f32[4,8,8]{2,1,0:T(8,128)}', space=vmem, size = 0x4000, scoped, tag = 'scratch operand']
  %s0 = inlined_call_operand.hbm [shape: f32[2,8,32], index: 0, kind: input, shape index: {}]
  %s1 = inlined_call_operand.hbm [shape: f32[32,32], index: 1, kind: input, shape index: {}]
  %s2 = inlined_call_operand.hbm [shape: f32[32,64], index: 2, kind: input, shape index: {}]
  %s3 = inlined_call_operand.hbm [shape: f32[32,32], index: 3, kind: input, shape index: {}]
  %s4 = inlined_call_operand.vmem [shape: f32[1,32], index: 4, kind: input, shape index: {}]
  %s5 = inlined_call_operand.vmem [shape: f32[1,64], index: 5, kind: input, shape index: {}]
  %s6 = inlined_call_operand.vmem [shape: f32[1,32], index: 6, kind: input, shape index: {}]
  %s7 = inlined_call_operand.hbm [shape: f32[2,8,32], index: 7, kind: output, shape index: {}]
  %s8 = sld [smem:[#allocation0]]
  $region81: #{tpu_custom_call.1} parent=0
    _
  %s10 = ssub.s32 1, %s8
  %s11 = scalar_select 0, %s10, %s8
  $region1: #{tpu_custom_call.1} parent=0
    #allocation7 [shape = 'u8[8192]{0}', space=vmem, size = 0x2000, scoped, tag = 'input window, operand 0']
    #allocation8 [shape = 's32[2]{0}', space=sflag, size = 0x8, scoped, tag = 'scoped memory for tpu_custom_call.1']
    #allocation9 [shape = 's32[2]{0}', space=sflag, size = 0x8, scoped, tag = 'scoped memory for tpu_custom_call.1']
    #allocation10 [shape = 'u8[16384]{0}', space=vmem, size = 0x4000, scoped, tag = 'input window, operand 1, single buffered']
    #allocation11 [shape = 's32[1]{0}', space=sflag, size = 0x4, scoped, tag = 'scoped memory for tpu_custom_call.1']
    #allocation12 [shape = 'u8[16384]{0}', space=vmem, size = 0x4000, scoped, tag = 'input window, operand 2, single buffered']
    #allocation13 [shape = 'u8[16384]{0}', space=vmem, size = 0x4000, scoped, tag = 'input window, operand 3, single buffered']
    #allocation14 [shape = 's32[1]{0}', space=sflag, size = 0x4, scoped, tag = 'scoped memory for tpu_custom_call.1']
    #allocation15 [shape = 'u8[8192]{0}', space=vmem, size = 0x2000, scoped, tag = 'output window, operand 0']
    %12 = vsyncpa [#allocation8], 0
    %s13 = scalar_lea.sflag [#allocation8], 1
    %14 = vsyncpa %s13, 0
    %15 = vsyncpa [#allocation11], 0
    %16 = vsyncpa [#allocation14], 0
    %17 = vsyncpa [#allocation9], 0
    %s18 = scalar_lea.sflag [#allocation9], 1
    %19 = vsyncpa %s18, 0
    loop: start=0, step=1, limit=4
    $region2: #{tpu_custom_call.1} parent=1 // loop_pre_header
      _
    $region3: #{tpu_custom_call.1} parent=1 // loop_header
      %s21 = sphi 0, %s25
      %p22 = scmp.ge.s32.totalorder %s21, 4
      %s28 = sphi 0, %s40
      %s29 = sphi 0, %s36
      %s30 = sphi 0, %s28
      %s31 = sphi 0, %s29
      %s32 = sphi 0, %s30
      %s33 = sphi 0, %s31
      %s43 = sphi 0, %s45
      %s46 = sphi 0, %s43
      %s47 = sphi 0, %s46
      %s63 = sphi 0, %s47
      %s67 = sphi 0, %s67
      %s69 = sphi 0, %s67
      %s70 = sphi 0, %s69
      %s84 = sphi 0, %s70
      %s88 = sphi 0, %s88
      %s90 = sphi 0, %s88
      %s91 = sphi 0, %s90
      %s105 = sphi 0, %s91
      %s109 = sphi 0, %s109
      %s111 = sphi 0, %s109
      %s112 = sphi 0, %s111
      %s126 = sphi 0, %s112
      %s130 = sphi 0, %s130
      %s132 = sphi 0, %s130
      %s133 = sphi 0, %s132
      %s147 = sphi 0, %s133
      %s151 = sphi 0, %s151
      %s153 = sphi 0, %s151
      %s154 = sphi 0, %s153
      %s168 = sphi 0, %s154
      %s172 = sphi 0, %s172
      %s174 = sphi 0, %s172
      %s175 = sphi 0, %s174
      %s189 = sphi 0, %s175
      %s197 = sphi 0, %s199
      %s200 = sphi 0, %s197
      %s201 = sphi 0, %s200
      %s217 = sphi 0, %s201
    $region4: #{tpu_custom_call.1} parent=1 // loop_header_branch
      %24 = sbr.rel (%p22) target = $region8
    $region5: #{tpu_custom_call.1} parent=1 // loop_body
      %s26 = ssub.s32 %s21, 1
      %s27 = ssub.s32 %s21, 2
      %s34 = sadd.s32 1, %s29
      %p35 = scmp.ge.s32.totalorder %s34, 1
      %s36 = scalar_select %p35, 0, %s34
      %s37 = sadd.s32 1, %s28
      %s38 = scalar_select %p35, %s37, %s28
      %p39 = scmp.ge.s32.totalorder %s38, 2
      %s40 = scalar_select %p39, 0, %s38
      %s41 = ssub.s32 %s28, %s40
      %p42 = scmp.eq.s32.totalorder %s41, 0
      %s44 = sadd.s32 %s43, 1
      %s45 = scalar_select %p42, %s43, %s44
      %p48 = pneg %p42
      %p49 = scmp.eq.s32.totalorder %s21, 1
      %p50 = por %p48, %p49
      %p51 = scmp.ne.s32.totalorder %s43, %s46
      %p52 = scmp.eq.s32.totalorder %s21, 0
      %p53 = por %p51, %p52
      %p54 = scmp.ne.s32.totalorder %s43, %s46
      %p55 = scmp.eq.s32.totalorder %s26, 1
      %p56 = por %p54, %p55
      %p57 = scmp.ne.s32.totalorder %s46, %s47
      %p58 = scmp.eq.s32.totalorder %s26, 0
      %p59 = por %p57, %p58
      %p60 = scmp.ne.s32.totalorder %s46, %s47
      %p61 = scmp.eq.s32.totalorder %s27, 1
      %p62 = por %p60, %p61
      %p64 = scmp.ne.s32.totalorder %s47, %s63
      %p65 = scmp.eq.s32.totalorder %s27, 0
      %p66 = por %p64, %p65
      %s68 = sadd.s32 %s67, 1
      %p71 = scmp.eq.s32.totalorder %s21, 1
      %p72 = scmp.ne.s32.totalorder %s67, %s69
      %p73 = scmp.eq.s32.totalorder %s21, 0
      %p74 = por %p72, %p73
      %p75 = scmp.ne.s32.totalorder %s67, %s69
      %p76 = scmp.eq.s32.totalorder %s26, 1
      %p77 = por %p75, %p76
      %p78 = scmp.ne.s32.totalorder %s69, %s70
      %p79 = scmp.eq.s32.totalorder %s26, 0
      %p80 = por %p78, %p79
      %p81 = scmp.ne.s32.totalorder %s69, %s70
      %p82 = scmp.eq.s32.totalorder %s27, 1
      %p83 = por %p81, %p82
      %p85 = scmp.ne.s32.totalorder %s70, %s84
      %p86 = scmp.eq.s32.totalorder %s27, 0
      %p87 = por %p85, %p86
      %s89 = sadd.s32 %s88, 1
      %p92 = scmp.eq.s32.totalorder %s21, 1
      %p93 = scmp.ne.s32.totalorder %s88, %s90
      %p94 = scmp.eq.s32.totalorder %s21, 0
      %p95 = por %p93, %p94
      %p96 = scmp.ne.s32.totalorder %s88, %s90
      %p97 = scmp.eq.s32.totalorder %s26, 1
      %p98 = por %p96, %p97
      %p99 = scmp.ne.s32.totalorder %s90, %s91
      %p100 = scmp.eq.s32.totalorder %s26, 0
      %p101 = por %p99, %p100
      %p102 = scmp.ne.s32.totalorder %s90, %s91
      %p103 = scmp.eq.s32.totalorder %s27, 1
      %p104 = por %p102, %p103
      %p106 = scmp.ne.s32.totalorder %s91, %s105
      %p107 = scmp.eq.s32.totalorder %s27, 0
      %p108 = por %p106, %p107
      %s110 = sadd.s32 %s109, 1
      %p113 = scmp.eq.s32.totalorder %s21, 1
      %p114 = scmp.ne.s32.totalorder %s109, %s111
      %p115 = scmp.eq.s32.totalorder %s21, 0
      %p116 = por %p114, %p115
      %p117 = scmp.ne.s32.totalorder %s109, %s111
      %p118 = scmp.eq.s32.totalorder %s26, 1
      %p119 = por %p117, %p118
      %p120 = scmp.ne.s32.totalorder %s111, %s112
      %p121 = scmp.eq.s32.totalorder %s26, 0
      %p122 = por %p120, %p121
      %p123 = scmp.ne.s32.totalorder %s111, %s112
      %p124 = scmp.eq.s32.totalorder %s27, 1
      %p125 = por %p123, %p124
      %p127 = scmp.ne.s32.totalorder %s112, %s126
      %p128 = scmp.eq.s32.totalorder %s27, 0
      %p129 = por %p127, %p128
      %s131 = sadd.s32 %s130, 1
      %p134 = scmp.eq.s32.totalorder %s21, 1
      %p135 = scmp.ne.s32.totalorder %s130, %s132
      %p136 = scmp.eq.s32.totalorder %s21, 0
      %p137 = por %p135, %p136
      %p138 = scmp.ne.s32.totalorder %s130, %s132
      %p139 = scmp.eq.s32.totalorder %s26, 1
      %p140 = por %p138, %p139
      %p141 = scmp.ne.s32.totalorder %s132, %s133
      %p142 = scmp.eq.s32.totalorder %s26, 0
      %p143 = por %p141, %p142
      %p144 = scmp.ne.s32.totalorder %s132, %s133
      %p145 = scmp.eq.s32.totalorder %s27, 1
      %p146 = por %p144, %p145
      %p148 = scmp.ne.s32.totalorder %s133, %s147
      %p149 = scmp.eq.s32.totalorder %s27, 0
      %p150 = por %p148, %p149
      %s152 = sadd.s32 %s151, 1
      %p155 = scmp.eq.s32.totalorder %s21, 1
      %p156 = scmp.ne.s32.totalorder %s151, %s153
      %p157 = scmp.eq.s32.totalorder %s21, 0
      %p158 = por %p156, %p157
      %p159 = scmp.ne.s32.totalorder %s151, %s153
      %p160 = scmp.eq.s32.totalorder %s26, 1
      %p161 = por %p159, %p160
      %p162 = scmp.ne.s32.totalorder %s153, %s154
      %p163 = scmp.eq.s32.totalorder %s26, 0
      %p164 = por %p162, %p163
      %p165 = scmp.ne.s32.totalorder %s153, %s154
      %p166 = scmp.eq.s32.totalorder %s27, 1
      %p167 = por %p165, %p166
      %p169 = scmp.ne.s32.totalorder %s154, %s168
      %p170 = scmp.eq.s32.totalorder %s27, 0
      %p171 = por %p169, %p170
      %s173 = sadd.s32 %s172, 1
      %p176 = scmp.eq.s32.totalorder %s21, 1
      %p177 = scmp.ne.s32.totalorder %s172, %s174
      %p178 = scmp.eq.s32.totalorder %s21, 0
      %p179 = por %p177, %p178
      %p180 = scmp.ne.s32.totalorder %s172, %s174
      %p181 = scmp.eq.s32.totalorder %s26, 1
      %p182 = por %p180, %p181
      %p183 = scmp.ne.s32.totalorder %s174, %s175
      %p184 = scmp.eq.s32.totalorder %s26, 0
      %p185 = por %p183, %p184
      %p186 = scmp.ne.s32.totalorder %s174, %s175
      %p187 = scmp.eq.s32.totalorder %s27, 1
      %p188 = por %p186, %p187
      %p190 = scmp.ne.s32.totalorder %s175, %s189
      %p191 = scmp.eq.s32.totalorder %s27, 0
      %p192 = por %p190, %p191
      %s193 = ssub.s32 %s28, %s40
      %s194 = ssub.s32 %s29, %s36
      %s195 = sor.u32 %s193, %s194
      %p196 = scmp.eq.s32.totalorder %s195, 0
      %s198 = sadd.s32 %s197, 1
      %s199 = scalar_select %p196, %s197, %s198
      %p202 = pneg %p196
      %p203 = scmp.eq.s32.totalorder %s21, 1
      %p204 = por %p202, %p203
      %p205 = scmp.ne.s32.totalorder %s197, %s200
      %p206 = scmp.eq.s32.totalorder %s21, 0
      %p207 = por %p205, %p206
      %p208 = scmp.ne.s32.totalorder %s197, %s200
      %p209 = scmp.eq.s32.totalorder %s26, 1
      %p210 = por %p208, %p209
      %p211 = scmp.ne.s32.totalorder %s200, %s201
      %p212 = scmp.eq.s32.totalorder %s26, 0
      %p213 = por %p211, %p212
      %p214 = scmp.ne.s32.totalorder %s200, %s201
      %p215 = scmp.eq.s32.totalorder %s27, 1
      %p216 = por %p214, %p215
      %p218 = scmp.ne.s32.totalorder %s201, %s217
      %p219 = scmp.eq.s32.totalorder %s27, 0
      %p220 = por %p218, %p219
      %p221 = scmp.le.s32.totalorder 1, %s21
      %p222 = scmp.lt.s32.totalorder %s21, 3
      %p223 = pnand %p221, %p222
      %p224 = pneg %p223
      // Predicated region
      $region9: #{tpu_custom_call.1} parent=5 // pred_check
        _
      $region10: #{tpu_custom_call.1} parent=5 // pred_check_branch
        %226 = sbr.rel (%p223) target = $region12
      $region11: #{tpu_custom_call.1} parent=5 // pred_region
        %s227 = ssub.s32 %s21, 1
        // Predicated region
        $region13: #{tpu_custom_call.1} parent=11 // pred_check
          %p228 = pneg %p80
        $region14: #{tpu_custom_call.1} parent=11 // pred_check_branch
          %230 = sbr.rel (%p228) target = $region16
        $region15: #{tpu_custom_call.1} parent=11 // pred_region
          %s232 = ssub.s32 512, 512
          %233 = vsyncadd [#allocation11], %s232
          %s234 = sshll.u32 [#allocation10], 4
          %s235 = int_to_ptr.vmem [resolvable:$true] %s234
          %240 = dma.hbm_to_vmem [thread:$0]  %s1, 512, %s235, [#allocation11], 128, 128, 8
        $region16: #{tpu_custom_call.1} parent=11 // pred_fallthru
          _
        // Predicated region
        $region17: #{tpu_custom_call.1} parent=11 // pred_check
          %p241 = pneg %p101
        $region18: #{tpu_custom_call.1} parent=11 // pred_check_branch
          %243 = sbr.rel (%p241) target = $region20
        $region19: #{tpu_custom_call.1} parent=11 // pred_region
          %s245 = ssub.s32 512, 512
          %246 = vsyncadd [#allocation11], %s245
          %s247 = sshll.u32 [#allocation12], 4
          %s248 = int_to_ptr.vmem [resolvable:$true] %s247
          %253 = dma.hbm_to_vmem [thread:$0]  %s2, 512, %s248, [#allocation11], 128, 128, 8
        $region20: #{tpu_custom_call.1} parent=11 // pred_fallthru
          _
        // Predicated region
        $region21: #{tpu_custom_call.1} parent=11 // pred_check
          %p254 = pneg %p122
        $region22: #{tpu_custom_call.1} parent=11 // pred_check_branch
          %256 = sbr.rel (%p254) target = $region24
        $region23: #{tpu_custom_call.1} parent=11 // pred_region
          %s258 = ssub.s32 512, 512
          %259 = vsyncadd [#allocation14], %s258
          %s260 = sshll.u32 [#allocation13], 4
          %s261 = int_to_ptr.vmem [resolvable:$true] %s260
          %266 = dma.hbm_to_vmem [thread:$0]  %s3, 512, %s261, [#allocation14], 128, 128, 8
        $region24: #{tpu_custom_call.1} parent=11 // pred_fallthru
          _
        // Predicated region
        $region25: #{tpu_custom_call.1} parent=11 // pred_check
          %p267 = pneg %p143
        $region26: #{tpu_custom_call.1} parent=11 // pred_check_branch
          %269 = sbr.rel (%p267) target = $region28
        $region27: #{tpu_custom_call.1} parent=11 // pred_region
          _
        $region28: #{tpu_custom_call.1} parent=11 // pred_fallthru
          _
        // Predicated region
        $region29: #{tpu_custom_call.1} parent=11 // pred_check
          %p270 = pneg %p164
        $region30: #{tpu_custom_call.1} parent=11 // pred_check_branch
          %272 = sbr.rel (%p270) target = $region32
        $region31: #{tpu_custom_call.1} parent=11 // pred_region
          _
        $region32: #{tpu_custom_call.1} parent=11 // pred_fallthru
          _
        // Predicated region
        $region33: #{tpu_custom_call.1} parent=11 // pred_check
          %p273 = pneg %p185
        $region34: #{tpu_custom_call.1} parent=11 // pred_check_branch
          %275 = sbr.rel (%p273) target = $region36
        $region35: #{tpu_custom_call.1} parent=11 // pred_region
          _
        $region36: #{tpu_custom_call.1} parent=11 // pred_fallthru
          _
      $region12: #{tpu_custom_call.1} parent=5 // pred_fallthru
        _
      %p276 = scmp.lt.s32.totalorder %s21, 2
      // Predicated region
      $region37: #{tpu_custom_call.1} parent=5 // pred_check
        %p277 = pneg %p276
      $region38: #{tpu_custom_call.1} parent=5 // pred_check_branch
        %279 = sbr.rel (%p277) target = $region40
      $region39: #{tpu_custom_call.1} parent=5 // pred_region
        // Predicated region
        $region41: #{tpu_custom_call.1} parent=39 // pred_check
          %p280 = pneg %p53
        $region42: #{tpu_custom_call.1} parent=39 // pred_check_branch
          %282 = sbr.rel (%p280) target = $region44
        $region43: #{tpu_custom_call.1} parent=39 // pred_region
          %s283 = sand.u32 %s43, 1
          %s284 = scalar_lea.sflag [#allocation8], %s283
          %s285 = sand.u32 %s43, 1
          %s286 = smul.addr %s285, 8
          %s287 = scalar_lea.vmem [#allocation7], %s286
          %s289 = ssub.s32 128, 128
          %290 = vsyncadd %s284, %s289
          %s291 = smul.addr %s28, 128
          %s292 = scalar_lea.hbm %s0, %s291
          %s294 = sshll.u32 %s287, 4
          %s295 = int_to_ptr.vmem [resolvable:$true] %s294
          %297 = dma.hbm_to_vmem [thread:$0]  %s292, 128, %s295, %s284
        $region44: #{tpu_custom_call.1} parent=39 // pred_fallthru
          _
      $region40: #{tpu_custom_call.1} parent=5 // pred_fallthru
        _
      %p298 = scmp.le.s32.totalorder 1, %s21
      %p299 = scmp.lt.s32.totalorder %s21, 3
      %p300 = pnand %p298, %p299
      %p301 = pneg %p300
      // Predicated region
      $region45: #{tpu_custom_call.1} parent=5 // pred_check
        _
      $region46: #{tpu_custom_call.1} parent=5 // pred_check_branch
        %303 = sbr.rel (%p300) target = $region48
      $region47: #{tpu_custom_call.1} parent=5 // pred_region
        %s304 = ssub.s32 %s21, 1
        %s305 = sand.u32 %s46, 1
        %s306 = scalar_lea.sflag [#allocation8], %s305
        %s307 = sand.u32 %s46, 1
        %s308 = smul.addr %s307, 8
        %s309 = scalar_lea.vmem [#allocation7], %s308
        // Predicated region
        $region49: #{tpu_custom_call.1} parent=47 // pred_check
          %p310 = pneg %p59
        $region50: #{tpu_custom_call.1} parent=47 // pred_check_branch
          %312 = sbr.rel (%p310) target = $region52
        $region51: #{tpu_custom_call.1} parent=47 // pred_region
          %313 = dma.done %s306, 128
        $region52: #{tpu_custom_call.1} parent=47 // pred_fallthru
          _
        // Predicated region
        $region53: #{tpu_custom_call.1} parent=47 // pred_check
          %p314 = pneg %p80
        $region54: #{tpu_custom_call.1} parent=47 // pred_check_branch
          %316 = sbr.rel (%p314) target = $region56
        $region55: #{tpu_custom_call.1} parent=47 // pred_region
          %317 = dma.done [#allocation11], 512
        $region56: #{tpu_custom_call.1} parent=47 // pred_fallthru
          _
        // Predicated region
        $region57: #{tpu_custom_call.1} parent=47 // pred_check
          %p318 = pneg %p101
        $region58: #{tpu_custom_call.1} parent=47 // pred_check_branch
          %320 = sbr.rel (%p318) target = $region60
        $region59: #{tpu_custom_call.1} parent=47 // pred_region
          %321 = dma.done [#allocation11], 512
        $region60: #{tpu_custom_call.1} parent=47 // pred_fallthru
          _
        // Predicated region
        $region61: #{tpu_custom_call.1} parent=47 // pred_check
          %p322 = pneg %p122
        $region62: #{tpu_custom_call.1} parent=47 // pred_check_branch
          %324 = sbr.rel (%p322) target = $region64
        $region63: #{tpu_custom_call.1} parent=47 // pred_region
          %325 = dma.done [#allocation14], 512
        $region64: #{tpu_custom_call.1} parent=47 // pred_fallthru
          _
        %s326 = sand.u32 %s46, 1
        %s327 = scalar_lea.sflag [#allocation8], %s326
        %s328 = sand.u32 %s46, 1
        %s329 = smul.addr %s328, 8
        %s330 = scalar_lea.vmem [#allocation7], %s329
        %p331 = pneg %p59
        %p332 = pneg %p56
        %p333 = pneg %p80
        %p334 = pneg %p77
        %p335 = pneg %p101
        %p336 = pneg %p98
        %p337 = pneg %p122
        %p338 = pneg %p119
        %p339 = pneg %p143
        %p340 = pneg %p140
        %p341 = pneg %p164
        %p342 = pneg %p161
        %p343 = pneg %p185
        %p344 = pneg %p182
        %p345 = pneg %p213
        %p346 = pneg %p210
        %s347 = sand.u32 %s200, 1
        %s348 = scalar_lea.sflag [#allocation9], %s347
        %s349 = sand.u32 %s200, 1
        %s350 = smul.addr %s349, 8
        %s351 = scalar_lea.vmem [#allocation15], %s350
        %p352 = scmp.eq.s32.totalorder %s31, 0
        // Predicated region
        $region65: #{tpu_custom_call.1} parent=47 // pred_check
          %p353 = pneg %p352
        $region66: #{tpu_custom_call.1} parent=47 // pred_check_branch
          %355 = sbr.rel (%p353) target = $region68
        $region67: #{tpu_custom_call.1} parent=47 // pred_region
          %v356 = vld [vmem:[%s5] sm:$0x1]
          %v357 = vld [vmem:[%s309] sm:$0xff]
          %v358 = vld [vmem:[#allocation12] sm:$0xff]
          %v359 = vld [vmem:[#allocation12 + $0x8] sm:$0xff]
          %v360 = vld [vmem:[#allocation12 + $0x10] sm:$0xff]
          %v361 = vld [vmem:[#allocation12 + $0x18] sm:$0xff]
          %v363 = vlaneseq
          %v364 = vshrl.u32 %v363, 7
          %v365 = vsub.s32 0, %v364
          %v366 = vrot.slane %v356, %v365
          %vm368 = vcmask 261120
          %v370 = vsel %vm368, %v357, 0
          %372 = vmatprep.subr.mxu0 0.0
          %373 = vmatpush1.msra.mxu0 %v358
          %374 = vmatprep.subr.mxu0 0.0
          %375 = vmatpush1.msra.mxu0 %v359
          %376 = vmatprep.subr.mxu0 0.0
          %377 = vmatpush1.msra.mxu0 %v360
          %378 = vmatprep.subr.mxu0 0.0
          %379 = vmatpush1.msra.mxu0 %v361
          %380 = vmatprep.subr.mxu0 0.0
          %381 = vmatpush1.msra.mxu0 0.0
          %382 = vmatprep.subr.mxu0 0.0
          %383 = vmatpush1.msra.mxu0 0.0
          %384 = vmatprep.subr.mxu0 0.0
          %385 = vmatpush1.msra.mxu0 0.0
          %386 = vmatprep.subr.mxu0 0.0
          %387 = vmatpush1.msra.mxu0 0.0
          %388 = vmatprep.subr.mxu0 0.0
          %389 = vmatpush1.msra.mxu0 0.0
          %390 = vmatprep.subr.mxu0 0.0
          %391 = vmatpush1.msra.mxu0 0.0
          %392 = vmatprep.subr.mxu0 0.0
          %393 = vmatpush1.msra.mxu0 0.0
          %394 = vmatprep.subr.mxu0 0.0
          %395 = vmatpush1.msra.mxu0 0.0
          %396 = vmatprep.subr.mxu0 0.0
          %397 = vmatpush1.msra.mxu0 0.0
          %398 = vmatprep.subr.mxu0 0.0
          %399 = vmatpush1.msra.mxu0 0.0
          %400 = vmatprep.subr.mxu0 0.0
          %401 = vmatpush1.msra.mxu0 0.0
          %402 = vmatprep.subr.mxu0 0.0
          %403 = vmatpush1.msra.mxu0 0.0
          %404 = vmatprep.subr.mxu0 0.0
          %405 = vmatpush1.msra.mxu0 0.0
          %406 = vmatprep.subr.mxu0 0.0
          %407 = vmatpush1.msra.mxu0 0.0
          %408 = vmatprep.subr.mxu0 0.0
          %409 = vmatpush1.msra.mxu0 0.0
          %410 = vmatprep.subr.mxu0 0.0
          %411 = vmatpush1.msra.mxu0 0.0
          %412 = vmatprep.subr.mxu0 0.0
          %413 = vmatpush1.msra.mxu0 0.0
          %414 = vmatprep.subr.mxu0 0.0
          %415 = vmatpush1.msra.mxu0 0.0
          %416 = vmatprep.subr.mxu0 0.0
          %417 = vmatpush1.msra.mxu0 0.0
          %418 = vmatprep.subr.mxu0 0.0
          %419 = vmatpush1.msra.mxu0 0.0
          %420 = vmatprep.subr.mxu0 0.0
          %421 = vmatpush1.msra.mxu0 0.0
          %422 = vmatprep.subr.mxu0 0.0
          %423 = vmatpush1.msra.mxu0 0.0
          %424 = vmatprep.subr.mxu0 0.0
          %425 = vmatpush1.msra.mxu0 0.0
          %426 = vmatprep.subr.mxu0 0.0
          %427 = vmatpush1.msra.mxu0 0.0
          %428 = vmatprep.subr.mxu0 0.0
          %429 = vmatpush1.msra.mxu0 0.0
          %430 = vmatprep.subr.mxu0 0.0
          %431 = vmatpush1.msra.mxu0 0.0
          %432 = vmatprep.subr.mxu0 0.0
          %433 = vmatpush1.msra.mxu0 0.0
          %434 = vmatprep.subr.mxu0 0.0
          %435 = vmatpush1.msra.mxu0 0.0
          %436 = vmatprep.mubr.f32.mxu0 0.0
          %437 = vmatmul.mubr.f32.gmra.mrb[0].mxu0 %v370
          %v438 = vpop.f32.mrb[0].mxu0
          %v439 = vadd.f32 %v366, %v438
          %v440 = vpop.f32.mrb[0].mxu0
          %441 = vdwg.mxu0
          %vm442 = vcmask 64512
          %443 = vst.msk [vmem:[#allocation2] sm:$0xff] %vm442, %v439
          %445 = vrot.lane.b32.xlu0 %v439, 96
          %v446 = vpop.permute.xlu0 %445
          %448 = vst.msk [vmem:[#allocation3] sm:$0xff] %vm442, %v446
          %449 = vrot.lane.b32.xlu0 %v439, 120
          %v450 = vpop.permute.xlu0 %449
          %s452 = scalar_lea.vmem [#allocation2], 8
          %453 = vst.msk [vmem:[%s452] sm:$0xff] %vm442, %v450
          %454 = vrot.lane.b32.xlu0 %v439, 88
          %v455 = vpop.permute.xlu0 %454
          %s457 = scalar_lea.vmem [#allocation3], 8
          %458 = vst.msk [vmem:[%s457] sm:$0xff] %vm442, %v455
          %459 = vrot.lane.b32.xlu0 %v439, 112
          %v460 = vpop.permute.xlu0 %459
          %s462 = scalar_lea.vmem [#allocation2], 16
          %463 = vst.msk [vmem:[%s462] sm:$0xff] %vm442, %v460
          %464 = vrot.lane.b32.xlu0 %v439, 80
          %v465 = vpop.permute.xlu0 %464
          %s467 = scalar_lea.vmem [#allocation3], 16
          %468 = vst.msk [vmem:[%s467] sm:$0xff] %vm442, %v465
          %469 = vrot.lane.b32.xlu0 %v439, 104
          %v470 = vpop.permute.xlu0 %469
          %s472 = scalar_lea.vmem [#allocation2], 24
          %473 = vst.msk [vmem:[%s472] sm:$0xff] %vm442, %v470
          %474 = vrot.lane.b32.xlu0 %v439, 72
          %v475 = vpop.permute.xlu0 %474
          %s477 = scalar_lea.vmem [#allocation3], 24
          %478 = vst.msk [vmem:[%s477] sm:$0xff] %vm442, %v475
        $region68: #{tpu_custom_call.1} parent=47 // pred_fallthru
          _
        %v479 = vld [vmem:[%s309] sm:$0xff]
        %v480 = vld [vmem:[#allocation10] sm:$0xff]
        %v481 = vld [vmem:[#allocation10 + $0x8] sm:$0xff]
        %v482 = vld [vmem:[#allocation10 + $0x10] sm:$0xff]
        %v483 = vld [vmem:[#allocation10 + $0x18] sm:$0xff]
        %v484 = vld [vmem:[%s4] sm:$0x1]
        %v486 = vlaneseq
        %v487 = vshrl.u32 %v486, 7
        %v488 = vsub.s32 0, %v487
        %v489 = vrot.slane %v484, %v488
        %vm491 = vcmask 261120
        %v493 = vsel %vm491, %v479, 0
        %495 = vmatprep.subr.mxu0 0.0
        %496 = vmatpush1.msra.mxu0 %v480
        %497 = vmatprep.subr.mxu0 0.0
        %498 = vmatpush1.msra.mxu0 %v481
        %499 = vmatprep.subr.mxu0 0.0
        %500 = vmatpush1.msra.mxu0 %v482
        %501 = vmatprep.subr.mxu0 0.0
        %502 = vmatpush1.msra.mxu0 %v483
        %503 = vmatprep.subr.mxu0 0.0
        %504 = vmatpush1.msra.mxu0 0.0
        %505 = vmatprep.subr.mxu0 0.0
        %506 = vmatpush1.msra.mxu0 0.0
        %507 = vmatprep.subr.mxu0 0.0
        %508 = vmatpush1.msra.mxu0 0.0
        %509 = vmatprep.subr.mxu0 0.0
        %510 = vmatpush1.msra.mxu0 0.0
        %511 = vmatprep.subr.mxu0 0.0
        %512 = vmatpush1.msra.mxu0 0.0
        %513 = vmatprep.subr.mxu0 0.0
        %514 = vmatpush1.msra.mxu0 0.0
        %515 = vmatprep.subr.mxu0 0.0
        %516 = vmatpush1.msra.mxu0 0.0
        %517 = vmatprep.subr.mxu0 0.0
        %518 = vmatpush1.msra.mxu0 0.0
        %519 = vmatprep.subr.mxu0 0.0
        %520 = vmatpush1.msra.mxu0 0.0
        %521 = vmatprep.subr.mxu0 0.0
        %522 = vmatpush1.msra.mxu0 0.0
        %523 = vmatprep.subr.mxu0 0.0
        %524 = vmatpush1.msra.mxu0 0.0
        %525 = vmatprep.subr.mxu0 0.0
        %526 = vmatpush1.msra.mxu0 0.0
        %527 = vmatprep.subr.mxu0 0.0
        %528 = vmatpush1.msra.mxu0 0.0
        %529 = vmatprep.subr.mxu0 0.0
        %530 = vmatpush1.msra.mxu0 0.0
        %531 = vmatprep.subr.mxu0 0.0
        %532 = vmatpush1.msra.mxu0 0.0
        %533 = vmatprep.subr.mxu0 0.0
        %534 = vmatpush1.msra.mxu0 0.0
        %535 = vmatprep.subr.mxu0 0.0
        %536 = vmatpush1.msra.mxu0 0.0
        %537 = vmatprep.subr.mxu0 0.0
        %538 = vmatpush1.msra.mxu0 0.0
        %539 = vmatprep.subr.mxu0 0.0
        %540 = vmatpush1.msra.mxu0 0.0
        %541 = vmatprep.subr.mxu0 0.0
        %542 = vmatpush1.msra.mxu0 0.0
        %543 = vmatprep.subr.mxu0 0.0
        %544 = vmatpush1.msra.mxu0 0.0
        %545 = vmatprep.subr.mxu0 0.0
        %546 = vmatpush1.msra.mxu0 0.0
        %547 = vmatprep.subr.mxu0 0.0
        %548 = vmatpush1.msra.mxu0 0.0
        %549 = vmatprep.subr.mxu0 0.0
        %550 = vmatpush1.msra.mxu0 0.0
        %551 = vmatprep.subr.mxu0 0.0
        %552 = vmatpush1.msra.mxu0 0.0
        %553 = vmatprep.subr.mxu0 0.0
        %554 = vmatpush1.msra.mxu0 0.0
        %555 = vmatprep.subr.mxu0 0.0
        %556 = vmatpush1.msra.mxu0 0.0
        %557 = vmatprep.subr.mxu0 0.0
        %558 = vmatpush1.msra.mxu0 0.0
        %559 = vmatprep.mubr.f32.mxu0 0.0
        %560 = vmatmul.mubr.f32.gmra.mrb[0].mxu0 %v493
        %v561 = vpop.f32.mrb[0].mxu0
        %v562 = vadd.f32 %v489, %v561
        %v563 = vpop.f32.mrb[0].mxu0
        %564 = vdwg.mxu0
        %566 = vrot.lane.b32.xlu0 %v562, 120
        %v567 = vpop.permute.xlu0 %566
        %568 = vrot.lane.b32.xlu0 %v562, 112
        %v569 = vpop.permute.xlu0 %568
        %570 = vrot.lane.b32.xlu0 %v562, 104
        %v571 = vpop.permute.xlu0 %570
        %vm572 = vcmask 7168
        %573 = vst.msk [vmem:[#allocation4] sm:$0xff] %vm572, -inf
        %574 = vst.msk [vmem:[#allocation4 + $0x8] sm:$0xff] %vm572, -inf
        %575 = vst.msk [vmem:[#allocation4 + $0x10] sm:$0xff] %vm572, -inf
        %576 = vst.msk [vmem:[#allocation4 + $0x18] sm:$0xff] %vm572, -inf
        %577 = vst.msk [vmem:[#allocation5] sm:$0xff] %vm572, 0.0
        %578 = vst.msk [vmem:[#allocation5 + $0x8] sm:$0xff] %vm572, 0.0
        %579 = vst.msk [vmem:[#allocation5 + $0x10] sm:$0xff] %vm572, 0.0
        %580 = vst.msk [vmem:[#allocation5 + $0x18] sm:$0xff] %vm572, 0.0
        %vm581 = vcmask 64512
        %582 = vst.msk [vmem:[#allocation6] sm:$0xff] %vm581, 0.0
        %583 = vst.msk [vmem:[#allocation6 + $0x8] sm:$0xff] %vm581, 0.0
        %584 = vst.msk [vmem:[#allocation6 + $0x10] sm:$0xff] %vm581, 0.0
        %585 = vst.msk [vmem:[#allocation6 + $0x18] sm:$0xff] %vm581, 0.0
        %v586 = vld [vmem:[#allocation2] sm:$0xff]
        %v587 = vld [vmem:[#allocation2 + $0x8] sm:$0xff]
        %v588 = vld [vmem:[#allocation2 + $0x10] sm:$0xff]
        %v589 = vld [vmem:[#allocation2 + $0x18] sm:$0xff]
        %v590 = vld [vmem:[#allocation3] sm:$0xff]
        %v591 = vld [vmem:[#allocation3 + $0x8] sm:$0xff]
        %v592 = vld [vmem:[#allocation3 + $0x10] sm:$0xff]
        %v593 = vld [vmem:[#allocation3 + $0x18] sm:$0xff]
        %v594 = vsel %vm581, %v562, 0
        %v597 = vsel %vm581, %v586, 0
        %599 = vmatprep.subr.mxu0 0.0
        %600 = vmatpush1.xpose.msra.mxu0 %v597
        %601 = vmatprep.subr.mxu0 0.0
        %602 = vmatpush1.xpose.msra.mxu0 0.0
        %603 = vmatprep.subr.mxu0 0.0
        %604 = vmatpush1.xpose.msra.mxu0 0.0
        %605 = vmatprep.subr.mxu0 0.0
        %606 = vmatpush1.xpose.msra.mxu0 0.0
        %607 = vmatprep.subr.mxu0 0.0
        %608 = vmatpush1.xpose.msra.mxu0 0.0
        %609 = vmatprep.subr.mxu0 0.0
        %610 = vmatpush1.xpose.msra.mxu0 0.0
        %611 = vmatprep.subr.mxu0 0.0
        %612 = vmatpush1.xpose.msra.mxu0 0.0
        %613 = vmatprep.subr.mxu0 0.0
        %614 = vmatpush1.xpose.msra.mxu0 0.0
        %615 = vmatprep.subr.mxu0 0.0
        %616 = vmatpush1.xpose.msra.mxu0 0.0
        %617 = vmatprep.subr.mxu0 0.0
        %618 = vmatpush1.xpose.msra.mxu0 0.0
        %619 = vmatprep.subr.mxu0 0.0
        %620 = vmatpush1.xpose.msra.mxu0 0.0
        %621 = vmatprep.subr.mxu0 0.0
        %622 = vmatpush1.xpose.msra.mxu0 0.0
        %623 = vmatprep.subr.mxu0 0.0
        %624 = vmatpush1.xpose.msra.mxu0 0.0
        %625 = vmatprep.subr.mxu0 0.0
        %626 = vmatpush1.xpose.msra.mxu0 0.0
        %627 = vmatprep.subr.mxu0 0.0
        %628 = vmatpush1.xpose.msra.mxu0 0.0
        %629 = vmatprep.subr.mxu0 0.0
        %630 = vmatpush1.xpose.msra.mxu0 0.0
        %631 = vmatprep.subr.mxu0 0.0
        %632 = vmatpush1.xpose.msra.mxu0 0.0
        %633 = vmatprep.subr.mxu0 0.0
        %634 = vmatpush1.xpose.msra.mxu0 0.0
        %635 = vmatprep.subr.mxu0 0.0
        %636 = vmatpush1.xpose.msra.mxu0 0.0
        %637 = vmatprep.subr.mxu0 0.0
        %638 = vmatpush1.xpose.msra.mxu0 0.0
        %639 = vmatprep.subr.mxu0 0.0
        %640 = vmatpush1.xpose.msra.mxu0 0.0
        %641 = vmatprep.subr.mxu0 0.0
        %642 = vmatpush1.xpose.msra.mxu0 0.0
        %643 = vmatprep.subr.mxu0 0.0
        %644 = vmatpush1.xpose.msra.mxu0 0.0
        %645 = vmatprep.subr.mxu0 0.0
        %646 = vmatpush1.xpose.msra.mxu0 0.0
        %647 = vmatprep.subr.mxu0 0.0
        %648 = vmatpush1.xpose.msra.mxu0 0.0
        %649 = vmatprep.subr.mxu0 0.0
        %650 = vmatpush1.xpose.msra.mxu0 0.0
        %651 = vmatprep.subr.mxu0 0.0
        %652 = vmatpush1.xpose.msra.mxu0 0.0
        %653 = vmatprep.subr.mxu0 0.0
        %654 = vmatpush1.xpose.msra.mxu0 0.0
        %655 = vmatprep.subr.mxu0 0.0
        %656 = vmatpush1.xpose.msra.mxu0 0.0
        %657 = vmatprep.subr.mxu0 0.0
        %658 = vmatpush1.xpose.msra.mxu0 0.0
        %659 = vmatprep.subr.mxu0 0.0
        %660 = vmatpush1.xpose.msra.mxu0 0.0
        %661 = vmatprep.subr.mxu0 0.0
        %662 = vmatpush1.xpose.msra.mxu0 0.0
        %663 = vmatprep.mubr.f32.mxu0 0.0
        %664 = vmatmul.mubr.f32.gmra.mrb[0].mxu0 %v594
        %v665 = vpop.f32.mrb[0].mxu0
        %v666 = vadd.f32 0.0, %v665
        %v667 = vpop.f32.mrb[0].mxu0
        %668 = vdwg.mxu0
        %v669 = vsel %vm581, %v567, 0
        %v672 = vsel %vm581, %v587, 0
        %674 = vmatprep.subr.mxu0 0.0
        %675 = vmatpush1.xpose.msra.mxu0 %v672
        %676 = vmatprep.subr.mxu0 0.0
        %677 = vmatpush1.xpose.msra.mxu0 0.0
        %678 = vmatprep.subr.mxu0 0.0
        %679 = vmatpush1.xpose.msra.mxu0 0.0
        %680 = vmatprep.subr.mxu0 0.0
        %681 = vmatpush1.xpose.msra.mxu0 0.0
        %682 = vmatprep.subr.mxu0 0.0
        %683 = vmatpush1.xpose.msra.mxu0 0.0
        %684 = vmatprep.subr.mxu0 0.0
        %685 = vmatpush1.xpose.msra.mxu0 0.0
        %686 = vmatprep.subr.mxu0 0.0
        %687 = vmatpush1.xpose.msra.mxu0 0.0
        %688 = vmatprep.subr.mxu0 0.0
        %689 = vmatpush1.xpose.msra.mxu0 0.0
        %690 = vmatprep.subr.mxu0 0.0
        %691 = vmatpush1.xpose.msra.mxu0 0.0
        %692 = vmatprep.subr.mxu0 0.0
        %693 = vmatpush1.xpose.msra.mxu0 0.0
        %694 = vmatprep.subr.mxu0 0.0
        %695 = vmatpush1.xpose.msra.mxu0 0.0
        %696 = vmatprep.subr.mxu0 0.0
        %697 = vmatpush1.xpose.msra.mxu0 0.0
        %698 = vmatprep.subr.mxu0 0.0
        %699 = vmatpush1.xpose.msra.mxu0 0.0
        %700 = vmatprep.subr.mxu0 0.0
        %701 = vmatpush1.xpose.msra.mxu0 0.0
        %702 = vmatprep.subr.mxu0 0.0
        %703 = vmatpush1.xpose.msra.mxu0 0.0
        %704 = vmatprep.subr.mxu0 0.0
        %705 = vmatpush1.xpose.msra.mxu0 0.0
        %706 = vmatprep.subr.mxu0 0.0
        %707 = vmatpush1.xpose.msra.mxu0 0.0
        %708 = vmatprep.subr.mxu0 0.0
        %709 = vmatpush1.xpose.msra.mxu0 0.0
        %710 = vmatprep.subr.mxu0 0.0
        %711 = vmatpush1.xpose.msra.mxu0 0.0
        %712 = vmatprep.subr.mxu0 0.0
        %713 = vmatpush1.xpose.msra.mxu0 0.0
        %714 = vmatprep.subr.mxu0 0.0
        %715 = vmatpush1.xpose.msra.mxu0 0.0
        %716 = vmatprep.subr.mxu0 0.0
        %717 = vmatpush1.xpose.msra.mxu0 0.0
        %718 = vmatprep.subr.mxu0 0.0
        %719 = vmatpush1.xpose.msra.mxu0 0.0
        %720 = vmatprep.subr.mxu0 0.0
        %721 = vmatpush1.xpose.msra.mxu0 0.0
        %722 = vmatprep.subr.mxu0 0.0
        %723 = vmatpush1.xpose.msra.mxu0 0.0
        %724 = vmatprep.subr.mxu0 0.0
        %725 = vmatpush1.xpose.msra.mxu0 0.0
        %726 = vmatprep.subr.mxu0 0.0
        %727 = vmatpush1.xpose.msra.mxu0 0.0
        %728 = vmatprep.subr.mxu0 0.0
        %729 = vmatpush1.xpose.msra.mxu0 0.0
        %730 = vmatprep.subr.mxu0 0.0
        %731 = vmatpush1.xpose.msra.mxu0 0.0
        %732 = vmatprep.subr.mxu0 0.0
        %733 = vmatpush1.xpose.msra.mxu0 0.0
        %734 = vmatprep.subr.mxu0 0.0
        %735 = vmatpush1.xpose.msra.mxu0 0.0
        %736 = vmatprep.subr.mxu0 0.0
        %737 = vmatpush1.xpose.msra.mxu0 0.0
        %738 = vmatprep.mubr.f32.mxu0 0.0
        %739 = vmatmul.mubr.f32.gmra.mrb[0].mxu0 %v669
        %v740 = vpop.f32.mrb[0].mxu0
        %v741 = vadd.f32 0.0, %v740
        %v742 = vpop.f32.mrb[0].mxu0
        %743 = vdwg.mxu0
        %v744 = vsel %vm581, %v569, 0
        %v747 = vsel %vm581, %v588, 0
        %749 = vmatprep.subr.mxu0 0.0
        %750 = vmatpush1.xpose.msra.mxu0 %v747
        %751 = vmatprep.subr.mxu0 0.0
        %752 = vmatpush1.xpose.msra.mxu0 0.0
        %753 = vmatprep.subr.mxu0 0.0
        %754 = vmatpush1.xpose.msra.mxu0 0.0
        %755 = vmatprep.subr.mxu0 0.0
        %756 = vmatpush1.xpose.msra.mxu0 0.0
        %757 = vmatprep.subr.mxu0 0.0
        %758 = vmatpush1.xpose.msra.mxu0 0.0
        %759 = vmatprep.subr.mxu0 0.0
        %760 = vmatpush1.xpose.msra.mxu0 0.0
        %761 = vmatprep.subr.mxu0 0.0
        %762 = vmatpush1.xpose.msra.mxu0 0.0
        %763 = vmatprep.subr.mxu0 0.0
        %764 = vmatpush1.xpose.msra.mxu0 0.0
        %765 = vmatprep.subr.mxu0 0.0
        %766 = vmatpush1.xpose.msra.mxu0 0.0
        %767 = vmatprep.subr.mxu0 0.0
        %768 = vmatpush1.xpose.msra.mxu0 0.0
        %769 = vmatprep.subr.mxu0 0.0
        %770 = vmatpush1.xpose.msra.mxu0 0.0
        %771 = vmatprep.subr.mxu0 0.0
        %772 = vmatpush1.xpose.msra.mxu0 0.0
        %773 = vmatprep.subr.mxu0 0.0
        %774 = vmatpush1.xpose.msra.mxu0 0.0
        %775 = vmatprep.subr.mxu0 0.0
        %776 = vmatpush1.xpose.msra.mxu0 0.0
        %777 = vmatprep.subr.mxu0 0.0
        %778 = vmatpush1.xpose.msra.mxu0 0.0
        %779 = vmatprep.subr.mxu0 0.0
        %780 = vmatpush1.xpose.msra.mxu0 0.0
        %781 = vmatprep.subr.mxu0 0.0
        %782 = vmatpush1.xpose.msra.mxu0 0.0
        %783 = vmatprep.subr.mxu0 0.0
        %784 = vmatpush1.xpose.msra.mxu0 0.0
        %785 = vmatprep.subr.mxu0 0.0
        %786 = vmatpush1.xpose.msra.mxu0 0.0
        %787 = vmatprep.subr.mxu0 0.0
        %788 = vmatpush1.xpose.msra.mxu0 0.0
        %789 = vmatprep.subr.mxu0 0.0
        %790 = vmatpush1.xpose.msra.mxu0 0.0
        %791 = vmatprep.subr.mxu0 0.0
        %792 = vmatpush1.xpose.msra.mxu0 0.0
        %793 = vmatprep.subr.mxu0 0.0
        %794 = vmatpush1.xpose.msra.mxu0 0.0
        %795 = vmatprep.subr.mxu0 0.0
        %796 = vmatpush1.xpose.msra.mxu0 0.0
        %797 = vmatprep.subr.mxu0 0.0
        %798 = vmatpush1.xpose.msra.mxu0 0.0
        %799 = vmatprep.subr.mxu0 0.0
        %800 = vmatpush1.xpose.msra.mxu0 0.0
        %801 = vmatprep.subr.mxu0 0.0
        %802 = vmatpush1.xpose.msra.mxu0 0.0
        %803 = vmatprep.subr.mxu0 0.0
        %804 = vmatpush1.xpose.msra.mxu0 0.0
        %805 = vmatprep.subr.mxu0 0.0
        %806 = vmatpush1.xpose.msra.mxu0 0.0
        %807 = vmatprep.subr.mxu0 0.0
        %808 = vmatpush1.xpose.msra.mxu0 0.0
        %809 = vmatprep.subr.mxu0 0.0
        %810 = vmatpush1.xpose.msra.mxu0 0.0
        %811 = vmatprep.subr.mxu0 0.0
        %812 = vmatpush1.xpose.msra.mxu0 0.0
        %813 = vmatprep.mubr.f32.mxu0 0.0
        %814 = vmatmul.mubr.f32.gmra.mrb[0].mxu0 %v744
        %v815 = vpop.f32.mrb[0].mxu0
        %v816 = vadd.f32 0.0, %v815
        %v817 = vpop.f32.mrb[0].mxu0
        %818 = vdwg.mxu0
        %v819 = vsel %vm581, %v571, 0
        %v822 = vsel %vm581, %v589, 0
        %824 = vmatprep.subr.mxu0 0.0
        %825 = vmatpush1.xpose.msra.mxu0 %v822
        %826 = vmatprep.subr.mxu0 0.0
        %827 = vmatpush1.xpose.msra.mxu0 0.0
        %828 = vmatprep.subr.mxu0 0.0
        %829 = vmatpush1.xpose.msra.mxu0 0.0
        %830 = vmatprep.subr.mxu0 0.0
        %831 = vmatpush1.xpose.msra.mxu0 0.0
        %832 = vmatprep.subr.mxu0 0.0
        %833 = vmatpush1.xpose.msra.mxu0 0.0
        %834 = vmatprep.subr.mxu0 0.0
        %835 = vmatpush1.xpose.msra.mxu0 0.0
        %836 = vmatprep.subr.mxu0 0.0
        %837 = vmatpush1.xpose.msra.mxu0 0.0
        %838 = vmatprep.subr.mxu0 0.0
        %839 = vmatpush1.xpose.msra.mxu0 0.0
        %840 = vmatprep.subr.mxu0 0.0
        %841 = vmatpush1.xpose.msra.mxu0 0.0
        %842 = vmatprep.subr.mxu0 0.0
        %843 = vmatpush1.xpose.msra.mxu0 0.0
        %844 = vmatprep.subr.mxu0 0.0
        %845 = vmatpush1.xpose.msra.mxu0 0.0
        %846 = vmatprep.subr.mxu0 0.0
        %847 = vmatpush1.xpose.msra.mxu0 0.0
        %848 = vmatprep.subr.mxu0 0.0
        %849 = vmatpush1.xpose.msra.mxu0 0.0
        %850 = vmatprep.subr.mxu0 0.0
        %851 = vmatpush1.xpose.msra.mxu0 0.0
        %852 = vmatprep.subr.mxu0 0.0
        %853 = vmatpush1.xpose.msra.mxu0 0.0
        %854 = vmatprep.subr.mxu0 0.0
        %855 = vmatpush1.xpose.msra.mxu0 0.0
        %856 = vmatprep.subr.mxu0 0.0
        %857 = vmatpush1.xpose.msra.mxu0 0.0
        %858 = vmatprep.subr.mxu0 0.0
        %859 = vmatpush1.xpose.msra.mxu0 0.0
        %860 = vmatprep.subr.mxu0 0.0
        %861 = vmatpush1.xpose.msra.mxu0 0.0
        %862 = vmatprep.subr.mxu0 0.0
        %863 = vmatpush1.xpose.msra.mxu0 0.0
        %864 = vmatprep.subr.mxu0 0.0
        %865 = vmatpush1.xpose.msra.mxu0 0.0
        %866 = vmatprep.subr.mxu0 0.0
        %867 = vmatpush1.xpose.msra.mxu0 0.0
        %868 = vmatprep.subr.mxu0 0.0
        %869 = vmatpush1.xpose.msra.mxu0 0.0
        %870 = vmatprep.subr.mxu0 0.0
        %871 = vmatpush1.xpose.msra.mxu0 0.0
        %872 = vmatprep.subr.mxu0 0.0
        %873 = vmatpush1.xpose.msra.mxu0 0.0
        %874 = vmatprep.subr.mxu0 0.0
        %875 = vmatpush1.xpose.msra.mxu0 0.0
        %876 = vmatprep.subr.mxu0 0.0
        %877 = vmatpush1.xpose.msra.mxu0 0.0
        %878 = vmatprep.subr.mxu0 0.0
        %879 = vmatpush1.xpose.msra.mxu0 0.0
        %880 = vmatprep.subr.mxu0 0.0
        %881 = vmatpush1.xpose.msra.mxu0 0.0
        %882 = vmatprep.subr.mxu0 0.0
        %883 = vmatpush1.xpose.msra.mxu0 0.0
        %884 = vmatprep.subr.mxu0 0.0
        %885 = vmatpush1.xpose.msra.mxu0 0.0
        %886 = vmatprep.subr.mxu0 0.0
        %887 = vmatpush1.xpose.msra.mxu0 0.0
        %888 = vmatprep.mubr.f32.mxu0 0.0
        %889 = vmatmul.mubr.f32.gmra.mrb[0].mxu0 %v819
        %v890 = vpop.f32.mrb[0].mxu0
        %v891 = vadd.f32 0.0, %v890
        %v892 = vpop.f32.mrb[0].mxu0
        %893 = vdwg.mxu0
        %v894 = vld [vmem:[#allocation4] sm:$0xff]
        %v895 = vld [vmem:[#allocation4 + $0x8] sm:$0xff]
        %v896 = vld [vmem:[#allocation4 + $0x10] sm:$0xff]
        %v897 = vld [vmem:[#allocation4 + $0x18] sm:$0xff]
        %v898 = vsel %vm581, %v666, -inf
        %899 = vmax.xlane.f32.xlu0 %v898
        %v900 = vpop.xlane.xlu0 %899
        %v901 = vsel %vm581, %v741, -inf
        %902 = vmax.xlane.f32.xlu0 %v901
        %v903 = vpop.xlane.xlu0 %902
        %v904 = vsel %vm581, %v816, -inf
        %905 = vmax.xlane.f32.xlu0 %v904
        %v906 = vpop.xlane.xlu0 %905
        %v907 = vsel %vm581, %v891, -inf
        %908 = vmax.xlane.f32.xlu0 %v907
        %v909 = vpop.xlane.xlu0 %908
        %v910 = vmax.f32 %v894, %v900
        %v911 = vmax.f32 %v895, %v903
        %v912 = vmax.f32 %v896, %v906
        %v913 = vmax.f32 %v897, %v909
        %v914 = vsub.f32 %v894, %v910
        %v915 = vsub.f32 %v895, %v911
        %v916 = vsub.f32 %v896, %v912
        %v917 = vsub.f32 %v897, %v913
        %v918 = vmul.f32 %v914, 1.442695
        %v919 = vpow.pop %v918
        %v920 = vmul.f32 %v915, 1.442695
        %v921 = vpow.pop %v920
        %v922 = vmul.f32 %v916, 1.442695
        %v923 = vpow.pop %v922
        %v924 = vmul.f32 %v917, 1.442695
        %v925 = vpow.pop %v924
        %927 = vset.pattern.permute.xlu0 0
        %928 = vperm.xlu0 %927, %v910
        %v929 = vpop.permute.xlu0 %928
        %932 = vset.pattern.permute.xlu0 0
        %933 = vperm.xlu0 %932, %v911
        %v934 = vpop.permute.xlu0 %933
        %937 = vset.pattern.permute.xlu0 0
        %938 = vperm.xlu0 %937, %v912
        %v939 = vpop.permute.xlu0 %938
        %942 = vset.pattern.permute.xlu0 0
        %943 = vperm.xlu0 %942, %v913
        %v944 = vpop.permute.xlu0 %943
        %v946 = vsub.f32 %v666, %v929
        %v947 = vsub.f32 %v741, %v934
        %v948 = vsub.f32 %v816, %v939
        %v949 = vsub.f32 %v891, %v944
        %v950 = vmul.f32 %v946, 1.442695
        %v951 = vpow.pop %v950
        %v952 = vmul.f32 %v947, 1.442695
        %v953 = vpow.pop %v952
        %v954 = vmul.f32 %v948, 1.442695
        %v955 = vpow.pop %v954
        %v956 = vmul.f32 %v949, 1.442695
        %v957 = vpow.pop %v956
        %v958 = vld [vmem:[#allocation5] sm:$0xff]
        %v959 = vld [vmem:[#allocation5 + $0x8] sm:$0xff]
        %v960 = vld [vmem:[#allocation5 + $0x10] sm:$0xff]
        %v961 = vld [vmem:[#allocation5 + $0x18] sm:$0xff]
        %v962 = vmul.f32 %v919, %v958
        %v963 = vmul.f32 %v921, %v959
        %v964 = vmul.f32 %v923, %v960
        %v965 = vmul.f32 %v925, %v961
        %v966 = vsel %vm581, %v951, 0.0
        %967 = vadd.xlane.f32.xlu0 %v966
        %v968 = vpop.xlane.xlu0 %967
        %v969 = vsel %vm581, %v953, 0.0
        %970 = vadd.xlane.f32.xlu0 %v969
        %v971 = vpop.xlane.xlu0 %970
        %v972 = vsel %vm581, %v955, 0.0
        %973 = vadd.xlane.f32.xlu0 %v972
        %v974 = vpop.xlane.xlu0 %973
        %v975 = vsel %vm581, %v957, 0.0
        %976 = vadd.xlane.f32.xlu0 %v975
        %v977 = vpop.xlane.xlu0 %976
        %v978 = vadd.f32 %v962, %v968
        %v979 = vadd.f32 %v963, %v971
        %v980 = vadd.f32 %v964, %v974
        %v981 = vadd.f32 %v965, %v977
        %982 = vst.msk [vmem:[#allocation5] sm:$0xff] %vm572, %v978
        %983 = vst.msk [vmem:[#allocation5 + $0x8] sm:$0xff] %vm572, %v979
        %984 = vst.msk [vmem:[#allocation5 + $0x10] sm:$0xff] %vm572, %v980
        %985 = vst.msk [vmem:[#allocation5 + $0x18] sm:$0xff] %vm572, %v981
        %v986 = vld [vmem:[#allocation6] sm:$0xff]
        %v987 = vld [vmem:[#allocation6 + $0x8] sm:$0xff]
        %v988 = vld [vmem:[#allocation6 + $0x10] sm:$0xff]
        %v989 = vld [vmem:[#allocation6 + $0x18] sm:$0xff]
        %991 = vset.pattern.permute.xlu0 0
        %992 = vperm.xlu0 %991, %v919
        %v993 = vpop.permute.xlu0 %992
        %996 = vset.pattern.permute.xlu0 0
        %997 = vperm.xlu0 %996, %v921
        %v998 = vpop.permute.xlu0 %997
        %1001 = vset.pattern.permute.xlu0 0
        %1002 = vperm.xlu0 %1001, %v923
        %v1003 = vpop.permute.xlu0 %1002
        %1006 = vset.pattern.permute.xlu0 0
        %1007 = vperm.xlu0 %1006, %v925
        %v1008 = vpop.permute.xlu0 %1007
        %v1010 = vmul.f32 %v993, %v986
        %v1011 = vmul.f32 %v998, %v987
        %v1012 = vmul.f32 %v1003, %v988
        %v1013 = vmul.f32 %v1008, %v989
        %v1015 = vsel %vm581, %v951, 0
        %1017 = vmatprep.subr.mxu0 0.0
        %1018 = vmatpush1.msra.mxu0 %v590
        %1019 = vmatprep.subr.mxu0 0.0
        %1020 = vmatpush1.msra.mxu0 0.0
        %1021 = vmatprep.subr.mxu0 0.0
        %1022 = vmatpush1.msra.mxu0 0.0
        %1023 = vmatprep.subr.mxu0 0.0
        %1024 = vmatpush1.msra.mxu0 0.0
        %1025 = vmatprep.subr.mxu0 0.0
        %1026 = vmatpush1.msra.mxu0 0.0
        %1027 = vmatprep.subr.mxu0 0.0
        %1028 = vmatpush1.msra.mxu0 0.0
        %1029 = vmatprep.subr.mxu0 0.0
        %1030 = vmatpush1.msra.mxu0 0.0
        %1031 = vmatprep.subr.mxu0 0.0
        %1032 = vmatpush1.msra.mxu0 0.0
        %1033 = vmatprep.subr.mxu0 0.0
        %1034 = vmatpush1.msra.mxu0 0.0
        %1035 = vmatprep.subr.mxu0 0.0
        %1036 = vmatpush1.msra.mxu0 0.0
        %1037 = vmatprep.subr.mxu0 0.0
        %1038 = vmatpush1.msra.mxu0 0.0
        %1039 = vmatprep.subr.mxu0 0.0
        %1040 = vmatpush1.msra.mxu0 0.0
        %1041 = vmatprep.subr.mxu0 0.0
        %1042 = vmatpush1.msra.mxu0 0.0
        %1043 = vmatprep.subr.mxu0 0.0
        %1044 = vmatpush1.msra.mxu0 0.0
        %1045 = vmatprep.subr.mxu0 0.0
        %1046 = vmatpush1.msra.mxu0 0.0
        %1047 = vmatprep.subr.mxu0 0.0
        %1048 = vmatpush1.msra.mxu0 0.0
        %1049 = vmatprep.subr.mxu0 0.0
        %1050 = vmatpush1.msra.mxu0 0.0
        %1051 = vmatprep.subr.mxu0 0.0
        %1052 = vmatpush1.msra.mxu0 0.0
        %1053 = vmatprep.subr.mxu0 0.0
        %1054 = vmatpush1.msra.mxu0 0.0
        %1055 = vmatprep.subr.mxu0 0.0
        %1056 = vmatpush1.msra.mxu0 0.0
        %1057 = vmatprep.subr.mxu0 0.0
        %1058 = vmatpush1.msra.mxu0 0.0
        %1059 = vmatprep.subr.mxu0 0.0
        %1060 = vmatpush1.msra.mxu0 0.0
        %1061 = vmatprep.subr.mxu0 0.0
        %1062 = vmatpush1.msra.mxu0 0.0
        %1063 = vmatprep.subr.mxu0 0.0
        %1064 = vmatpush1.msra.mxu0 0.0
        %1065 = vmatprep.subr.mxu0 0.0
        %1066 = vmatpush1.msra.mxu0 0.0
        %1067 = vmatprep.subr.mxu0 0.0
        %1068 = vmatpush1.msra.mxu0 0.0
        %1069 = vmatprep.subr.mxu0 0.0
        %1070 = vmatpush1.msra.mxu0 0.0
        %1071 = vmatprep.subr.mxu0 0.0
        %1072 = vmatpush1.msra.mxu0 0.0
        %1073 = vmatprep.subr.mxu0 0.0
        %1074 = vmatpush1.msra.mxu0 0.0
        %1075 = vmatprep.subr.mxu0 0.0
        %1076 = vmatpush1.msra.mxu0 0.0
        %1077 = vmatprep.subr.mxu0 0.0
        %1078 = vmatpush1.msra.mxu0 0.0
        %1079 = vmatprep.subr.mxu0 0.0
        %1080 = vmatpush1.msra.mxu0 0.0
        %1081 = vmatprep.mubr.f32.mxu0 0.0
        %1082 = vmatmul.mubr.f32.gmra.mrb[0].mxu0 %v1015
        %v1083 = vpop.f32.mrb[0].mxu0
        %v1084 = vadd.f32 0.0, %v1083
        %v1085 = vpop.f32.mrb[0].mxu0
        %1086 = vdwg.mxu0
        %v1088 = vsel %vm581, %v953, 0
        %1090 = vmatprep.subr.mxu0 0.0
        %1091 = vmatpush1.msra.mxu0 %v591
        %1092 = vmatprep.subr.mxu0 0.0
        %1093 = vmatpush1.msra.mxu0 0.0
        %1094 = vmatprep.subr.mxu0 0.0
        %1095 = vmatpush1.msra.mxu0 0.0
        %1096 = vmatprep.subr.mxu0 0.0
        %1097 = vmatpush1.msra.mxu0 0.0
        %1098 = vmatprep.subr.mxu0 0.0
        %1099 = vmatpush1.msra.mxu0 0.0
        %1100 = vmatprep.subr.mxu0 0.0
        %1101 = vmatpush1.msra.mxu0 0.0
        %1102 = vmatprep.subr.mxu0 0.0
        %1103 = vmatpush1.msra.mxu0 0.0
        %1104 = vmatprep.subr.mxu0 0.0
        %1105 = vmatpush1.msra.mxu0 0.0
        %1106 = vmatprep.subr.mxu0 0.0
        %1107 = vmatpush1.msra.mxu0 0.0
        %1108 = vmatprep.subr.mxu0 0.0
        %1109 = vmatpush1.msra.mxu0 0.0
        %1110 = vmatprep.subr.mxu0 0.0
        %1111 = vmatpush1.msra.mxu0 0.0
        %1112 = vmatprep.subr.mxu0 0.0
        %1113 = vmatpush1.msra.mxu0 0.0
        %1114 = vmatprep.subr.mxu0 0.0
        %1115 = vmatpush1.msra.mxu0 0.0
        %1116 = vmatprep.subr.mxu0 0.0
        %1117 = vmatpush1.msra.mxu0 0.0
        %1118 = vmatprep.subr.mxu0 0.0
        %1119 = vmatpush1.msra.mxu0 0.0
        %1120 = vmatprep.subr.mxu0 0.0
        %1121 = vmatpush1.msra.mxu0 0.0
        %1122 = vmatprep.subr.mxu0 0.0
        %1123 = vmatpush1.msra.mxu0 0.0
        %1124 = vmatprep.subr.mxu0 0.0
        %1125 = vmatpush1.msra.mxu0 0.0
        %1126 = vmatprep.subr.mxu0 0.0
        %1127 = vmatpush1.msra.mxu0 0.0
        %1128 = vmatprep.subr.mxu0 0.0
        %1129 = vmatpush1.msra.mxu0 0.0
        %1130 = vmatprep.subr.mxu0 0.0
        %1131 = vmatpush1.msra.mxu0 0.0
        %1132 = vmatprep.subr.mxu0 0.0
        %1133 = vmatpush1.msra.mxu0 0.0
        %1134 = vmatprep.subr.mxu0 0.0
        %1135 = vmatpush1.msra.mxu0 0.0
        %1136 = vmatprep.subr.mxu0 0.0
        %1137 = vmatpush1.msra.mxu0 0.0
        %1138 = vmatprep.subr.mxu0 0.0
        %1139 = vmatpush1.msra.mxu0 0.0
        %1140 = vmatprep.subr.mxu0 0.0
        %1141 = vmatpush1.msra.mxu0 0.0
        %1142 = vmatprep.subr.mxu0 0.0
        %1143 = vmatpush1.msra.mxu0 0.0
        %1144 = vmatprep.subr.mxu0 0.0
        %1145 = vmatpush1.msra.mxu0 0.0
        %1146 = vmatprep.subr.mxu0 0.0
        %1147 = vmatpush1.msra.mxu0 0.0
        %1148 = vmatprep.subr.mxu0 0.0
        %1149 = vmatpush1.msra.mxu0 0.0
        %1150 = vmatprep.subr.mxu0 0.0
        %1151 = vmatpush1.msra.mxu0 0.0
        %1152 = vmatprep.subr.mxu0 0.0
        %1153 = vmatpush1.msra.mxu0 0.0
        %1154 = vmatprep.mubr.f32.mxu0 0.0
        %1155 = vmatmul.mubr.f32.gmra.mrb[0].mxu0 %v1088
        %v1156 = vpop.f32.mrb[0].mxu0
        %v1157 = vadd.f32 0.0, %v1156
        %v1158 = vpop.f32.mrb[0].mxu0
        %1159 = vdwg.mxu0
        %v1161 = vsel %vm581, %v955, 0
        %1163 = vmatprep.subr.mxu0 0.0
        %1164 = vmatpush1.msra.mxu0 %v592
        %1165 = vmatprep.subr.mxu0 0.0
        %1166 = vmatpush1.msra.mxu0 0.0
        %1167 = vmatprep.subr.mxu0 0.0
        %1168 = vmatpush1.msra.mxu0 0.0
        %1169 = vmatprep.subr.mxu0 0.0
        %1170 = vmatpush1.msra.mxu0 0.0
        %1171 = vmatprep.subr.mxu0 0.0
        %1172 = vmatpush1.msra.mxu0 0.0
        %1173 = vmatprep.subr.mxu0 0.0
        %1174 = vmatpush1.msra.mxu0 0.0
        %1175 = vmatprep.subr.mxu0 0.0
        %1176 = vmatpush1.msra.mxu0 0.0
        %1177 = vmatprep.subr.mxu0 0.0
        %1178 = vmatpush1.msra.mxu0 0.0
        %1179 = vmatprep.subr.mxu0 0.0
        %1180 = vmatpush1.msra.mxu0 0.0
        %1181 = vmatprep.subr.mxu0 0.0
        %1182 = vmatpush1.msra.mxu0 0.0
        %1183 = vmatprep.subr.mxu0 0.0
        %1184 = vmatpush1.msra.mxu0 0.0
        %1185 = vmatprep.subr.mxu0 0.0
        %1186 = vmatpush1.msra.mxu0 0.0
        %1187 = vmatprep.subr.mxu0 0.0
        %1188 = vmatpush1.msra.mxu0 0.0
        %1189 = vmatprep.subr.mxu0 0.0
        %1190 = vmatpush1.msra.mxu0 0.0
        %1191 = vmatprep.subr.mxu0 0.0
        %1192 = vmatpush1.msra.mxu0 0.0
        %1193 = vmatprep.subr.mxu0 0.0
        %1194 = vmatpush1.msra.mxu0 0.0
        %1195 = vmatprep.subr.mxu0 0.0
        %1196 = vmatpush1.msra.mxu0 0.0
        %1197 = vmatprep.subr.mxu0 0.0
        %1198 = vmatpush1.msra.mxu0 0.0
        %1199 = vmatprep.subr.mxu0 0.0
        %1200 = vmatpush1.msra.mxu0 0.0
        %1201 = vmatprep.subr.mxu0 0.0
        %1202 = vmatpush1.msra.mxu0 0.0
        %1203 = vmatprep.subr.mxu0 0.0
        %1204 = vmatpush1.msra.mxu0 0.0
        %1205 = vmatprep.subr.mxu0 0.0
        %1206 = vmatpush1.msra.mxu0 0.0
        %1207 = vmatprep.subr.mxu0 0.0
        %1208 = vmatpush1.msra.mxu0 0.0
        %1209 = vmatprep.subr.mxu0 0.0
        %1210 = vmatpush1.msra.mxu0 0.0
        %1211 = vmatprep.subr.mxu0 0.0
        %1212 = vmatpush1.msra.mxu0 0.0
        %1213 = vmatprep.subr.mxu0 0.0
        %1214 = vmatpush1.msra.mxu0 0.0
        %1215 = vmatprep.subr.mxu0 0.0
        %1216 = vmatpush1.msra.mxu0 0.0
        %1217 = vmatprep.subr.mxu0 0.0
        %1218 = vmatpush1.msra.mxu0 0.0
        %1219 = vmatprep.subr.mxu0 0.0
        %1220 = vmatpush1.msra.mxu0 0.0
        %1221 = vmatprep.subr.mxu0 0.0
        %1222 = vmatpush1.msra.mxu0 0.0
        %1223 = vmatprep.subr.mxu0 0.0
        %1224 = vmatpush1.msra.mxu0 0.0
        %1225 = vmatprep.subr.mxu0 0.0
        %1226 = vmatpush1.msra.mxu0 0.0
        %1227 = vmatprep.mubr.f32.mxu0 0.0
        %1228 = vmatmul.mubr.f32.gmra.mrb[0].mxu0 %v1161
        %v1229 = vpop.f32.mrb[0].mxu0
        %v1230 = vadd.f32 0.0, %v1229
        %v1231 = vpop.f32.mrb[0].mxu0
        %1232 = vdwg.mxu0
        %v1234 = vsel %vm581, %v957, 0
        %1236 = vmatprep.subr.mxu0 0.0
        %1237 = vmatpush1.msra.mxu0 %v593
        %1238 = vmatprep.subr.mxu0 0.0
        %1239 = vmatpush1.msra.mxu0 0.0
        %1240 = vmatprep.subr.mxu0 0.0
        %1241 = vmatpush1.msra.mxu0 0.0
        %1242 = vmatprep.subr.mxu0 0.0
        %1243 = vmatpush1.msra.mxu0 0.0
        %1244 = vmatprep.subr.mxu0 0.0
        %1245 = vmatpush1.msra.mxu0 0.0
        %1246 = vmatprep.subr.mxu0 0.0
        %1247 = vmatpush1.msra.mxu0 0.0
        %1248 = vmatprep.subr.mxu0 0.0
        %1249 = vmatpush1.msra.mxu0 0.0
        %1250 = vmatprep.subr.mxu0 0.0
        %1251 = vmatpush1.msra.mxu0 0.0
        %1252 = vmatprep.subr.mxu0 0.0
        %1253 = vmatpush1.msra.mxu0 0.0
        %1254 = vmatprep.subr.mxu0 0.0
        %1255 = vmatpush1.msra.mxu0 0.0
        %1256 = vmatprep.subr.mxu0 0.0
        %1257 = vmatpush1.msra.mxu0 0.0
        %1258 = vmatprep.subr.mxu0 0.0
        %1259 = vmatpush1.msra.mxu0 0.0
        %1260 = vmatprep.subr.mxu0 0.0
        %1261 = vmatpush1.msra.mxu0 0.0
        %1262 = vmatprep.subr.mxu0 0.0
        %1263 = vmatpush1.msra.mxu0 0.0
        %1264 = vmatprep.subr.mxu0 0.0
        %1265 = vmatpush1.msra.mxu0 0.0
        %1266 = vmatprep.subr.mxu0 0.0
        %1267 = vmatpush1.msra.mxu0 0.0
        %1268 = vmatprep.subr.mxu0 0.0
        %1269 = vmatpush1.msra.mxu0 0.0
        %1270 = vmatprep.subr.mxu0 0.0
        %1271 = vmatpush1.msra.mxu0 0.0
        %1272 = vmatprep.subr.mxu0 0.0
        %1273 = vmatpush1.msra.mxu0 0.0
        %1274 = vmatprep.subr.mxu0 0.0
        %1275 = vmatpush1.msra.mxu0 0.0
        %1276 = vmatprep.subr.mxu0 0.0
        %1277 = vmatpush1.msra.mxu0 0.0
        %1278 = vmatprep.subr.mxu0 0.0
        %1279 = vmatpush1.msra.mxu0 0.0
        %1280 = vmatprep.subr.mxu0 0.0
        %1281 = vmatpush1.msra.mxu0 0.0
        %1282 = vmatprep.subr.mxu0 0.0
        %1283 = vmatpush1.msra.mxu0 0.0
        %1284 = vmatprep.subr.mxu0 0.0
        %1285 = vmatpush1.msra.mxu0 0.0
        %1286 = vmatprep.subr.mxu0 0.0
        %1287 = vmatpush1.msra.mxu0 0.0
        %1288 = vmatprep.subr.mxu0 0.0
        %1289 = vmatpush1.msra.mxu0 0.0
        %1290 = vmatprep.subr.mxu0 0.0
        %1291 = vmatpush1.msra.mxu0 0.0
        %1292 = vmatprep.subr.mxu0 0.0
        %1293 = vmatpush1.msra.mxu0 0.0
        %1294 = vmatprep.subr.mxu0 0.0
        %1295 = vmatpush1.msra.mxu0 0.0
        %1296 = vmatprep.subr.mxu0 0.0
        %1297 = vmatpush1.msra.mxu0 0.0
        %1298 = vmatprep.subr.mxu0 0.0
        %1299 = vmatpush1.msra.mxu0 0.0
        %1300 = vmatprep.mubr.f32.mxu0 0.0
        %1301 = vmatmul.mubr.f32.gmra.mrb[0].mxu0 %v1234
        %v1302 = vpop.f32.mrb[0].mxu0
        %v1303 = vadd.f32 0.0, %v1302
        %v1304 = vpop.f32.mrb[0].mxu0
        %1305 = vdwg.mxu0
        %v1306 = vadd.f32 %v1010, %v1084
        %v1307 = vadd.f32 %v1011, %v1157
        %v1308 = vadd.f32 %v1012, %v1230
        %v1309 = vadd.f32 %v1013, %v1303
        %1310 = vst.msk [vmem:[#allocation6] sm:$0xff] %vm581, %v1306
        %1311 = vst.msk [vmem:[#allocation6 + $0x8] sm:$0xff] %vm581, %v1307
        %1312 = vst.msk [vmem:[#allocation6 + $0x10] sm:$0xff] %vm581, %v1308
        %1313 = vst.msk [vmem:[#allocation6 + $0x18] sm:$0xff] %vm581, %v1309
        %1314 = vst.msk [vmem:[#allocation4] sm:$0xff] %vm572, %v910
        %1315 = vst.msk [vmem:[#allocation4 + $0x8] sm:$0xff] %vm572, %v911
        %1316 = vst.msk [vmem:[#allocation4 + $0x10] sm:$0xff] %vm572, %v912
        %1317 = vst.msk [vmem:[#allocation4 + $0x18] sm:$0xff] %vm572, %v913
        %v1318 = vld [vmem:[#allocation5] sm:$0xff]
        %v1319 = vld [vmem:[#allocation5 + $0x8] sm:$0xff]
        %v1320 = vld [vmem:[#allocation5 + $0x10] sm:$0xff]
        %v1321 = vld [vmem:[#allocation5 + $0x18] sm:$0xff]
        %v1322 = vrcp.pop %v1318
        %v1323 = vrcp.pop %v1319
        %v1324 = vrcp.pop %v1320
        %v1325 = vrcp.pop %v1321
        %v1326 = vld [vmem:[#allocation6] sm:$0xff]
        %v1327 = vld [vmem:[#allocation6 + $0x8] sm:$0xff]
        %v1328 = vld [vmem:[#allocation6 + $0x10] sm:$0xff]
        %v1329 = vld [vmem:[#allocation6 + $0x18] sm:$0xff]
        %1331 = vset.pattern.permute.xlu0 0
        %1332 = vperm.xlu0 %1331, %v1322
        %v1333 = vpop.permute.xlu0 %1332
        %1336 = vset.pattern.permute.xlu0 0
        %1337 = vperm.xlu0 %1336, %v1323
        %v1338 = vpop.permute.xlu0 %1337
        %1341 = vset.pattern.permute.xlu0 0
        %1342 = vperm.xlu0 %1341, %v1324
        %v1343 = vpop.permute.xlu0 %1342
        %1346 = vset.pattern.permute.xlu0 0
        %1347 = vperm.xlu0 %1346, %v1325
        %v1348 = vpop.permute.xlu0 %1347
        %v1350 = vmul.f32 %v1326, %v1333
        %v1351 = vmul.f32 %v1327, %v1338
        %v1352 = vmul.f32 %v1328, %v1343
        %v1353 = vmul.f32 %v1329, %v1348
        %1355 = vrot.lane.b32.xlu0 %v1351, 8
        %v1356 = vpop.permute.xlu0 %1355
        %1359 = vrot.lane.b32.xlu0 %v1352, 16
        %v1360 = vpop.permute.xlu0 %1359
        %1363 = vrot.lane.b32.xlu0 %v1353, 24
        %v1364 = vpop.permute.xlu0 %1363
        %v1366 = vsel %vm581, %v1350, %v1356
        %vm1367 = vcmask 130048
        %v1368 = vsel %vm1367, %v1366, %v1360
        %vm1369 = vcmask 195584
        %v1370 = vsel %vm1369, %v1368, %v1364
        %v1371 = vld [vmem:[#allocation13] sm:$0xff]
        %v1372 = vld [vmem:[#allocation13 + $0x8] sm:$0xff]
        %v1373 = vld [vmem:[#allocation13 + $0x10] sm:$0xff]
        %v1374 = vld [vmem:[#allocation13 + $0x18] sm:$0xff]
        %v1375 = vld [vmem:[%s6] sm:$0x1]
        %v1377 = vlaneseq
        %v1378 = vshrl.u32 %v1377, 7
        %v1379 = vsub.s32 0, %v1378
        %v1380 = vrot.slane %v1375, %v1379
        %v1383 = vsel %vm491, %v1370, 0
        %1385 = vmatprep.subr.mxu0 0.0
        %1386 = vmatpush1.msra.mxu0 %v1371
        %1387 = vmatprep.subr.mxu0 0.0
        %1388 = vmatpush1.msra.mxu0 %v1372
        %1389 = vmatprep.subr.mxu0 0.0
        %1390 = vmatpush1.msra.mxu0 %v1373
        %1391 = vmatprep.subr.mxu0 0.0
        %1392 = vmatpush1.msra.mxu0 %v1374
        %1393 = vmatprep.subr.mxu0 0.0
        %1394 = vmatpush1.msra.mxu0 0.0
        %1395 = vmatprep.subr.mxu0 0.0
        %1396 = vmatpush1.msra.mxu0 0.0
        %1397 = vmatprep.subr.mxu0 0.0
        %1398 = vmatpush1.msra.mxu0 0.0
        %1399 = vmatprep.subr.mxu0 0.0
        %1400 = vmatpush1.msra.mxu0 0.0
        %1401 = vmatprep.subr.mxu0 0.0
        %1402 = vmatpush1.msra.mxu0 0.0
        %1403 = vmatprep.subr.mxu0 0.0
        %1404 = vmatpush1.msra.mxu0 0.0
        %1405 = vmatprep.subr.mxu0 0.0
        %1406 = vmatpush1.msra.mxu0 0.0
        %1407 = vmatprep.subr.mxu0 0.0
        %1408 = vmatpush1.msra.mxu0 0.0
        %1409 = vmatprep.subr.mxu0 0.0
        %1410 = vmatpush1.msra.mxu0 0.0
        %1411 = vmatprep.subr.mxu0 0.0
        %1412 = vmatpush1.msra.mxu0 0.0
        %1413 = vmatprep.subr.mxu0 0.0
        %1414 = vmatpush1.msra.mxu0 0.0
        %1415 = vmatprep.subr.mxu0 0.0
        %1416 = vmatpush1.msra.mxu0 0.0
        %1417 = vmatprep.subr.mxu0 0.0
        %1418 = vmatpush1.msra.mxu0 0.0
        %1419 = vmatprep.subr.mxu0 0.0
        %1420 = vmatpush1.msra.mxu0 0.0
        %1421 = vmatprep.subr.mxu0 0.0
        %1422 = vmatpush1.msra.mxu0 0.0
        %1423 = vmatprep.subr.mxu0 0.0
        %1424 = vmatpush1.msra.mxu0 0.0
        %1425 = vmatprep.subr.mxu0 0.0
        %1426 = vmatpush1.msra.mxu0 0.0
        %1427 = vmatprep.subr.mxu0 0.0
        %1428 = vmatpush1.msra.mxu0 0.0
        %1429 = vmatprep.subr.mxu0 0.0
        %1430 = vmatpush1.msra.mxu0 0.0
        %1431 = vmatprep.subr.mxu0 0.0
        %1432 = vmatpush1.msra.mxu0 0.0
        %1433 = vmatprep.subr.mxu0 0.0
        %1434 = vmatpush1.msra.mxu0 0.0
        %1435 = vmatprep.subr.mxu0 0.0
        %1436 = vmatpush1.msra.mxu0 0.0
        %1437 = vmatprep.subr.mxu0 0.0
        %1438 = vmatpush1.msra.mxu0 0.0
        %1439 = vmatprep.subr.mxu0 0.0
        %1440 = vmatpush1.msra.mxu0 0.0
        %1441 = vmatprep.subr.mxu0 0.0
        %1442 = vmatpush1.msra.mxu0 0.0
        %1443 = vmatprep.subr.mxu0 0.0
        %1444 = vmatpush1.msra.mxu0 0.0
        %1445 = vmatprep.subr.mxu0 0.0
        %1446 = vmatpush1.msra.mxu0 0.0
        %1447 = vmatprep.subr.mxu0 0.0
        %1448 = vmatpush1.msra.mxu0 0.0
        %1449 = vmatprep.mubr.f32.mxu0 0.0
        %1450 = vmatmul.mubr.f32.gmra.mrb[0].mxu0 %v1383
        %v1451 = vpop.f32.mrb[0].mxu0
        %v1452 = vadd.f32 %v1380, %v1451
        %v1453 = vpop.f32.mrb[0].mxu0
        %1454 = vdwg.mxu0
        %1455 = vst.msk [vmem:[%s351] sm:$0xff] %vm491, %v1452
        %s1456 = sand.u32 %s200, 1
        %s1457 = scalar_lea.sflag [#allocation9], %s1456
        %s1458 = sand.u32 %s200, 1
        %s1459 = smul.addr %s1458, 8
        %s1460 = scalar_lea.vmem [#allocation15], %s1459
        // Predicated region
        $region69: #{tpu_custom_call.1} parent=47 // pred_check
          %p1461 = pneg %p210
        $region70: #{tpu_custom_call.1} parent=47 // pred_check_branch
          %1463 = sbr.rel (%p1461) target = $region72
        $region71: #{tpu_custom_call.1} parent=47 // pred_region
          %s1465 = ssub.s32 128, 128
          %1466 = vsyncadd %s1457, %s1465
          %s1467 = sadd.s32 %s31, %s30
          %s1468 = smul.addr %s1467, 128
          %s1469 = scalar_lea.hbm %s7, %s1468
          %s1471 = sshll.u32 %s1460, 4
          %s1472 = int_to_ptr.vmem [resolvable:$true] %s1471
          %1474 = dma.vmem_to_hbm [thread:$0]  %s1472, 128, %s1469, %s1457
        $region72: #{tpu_custom_call.1} parent=47 // pred_fallthru
          _
      $region48: #{tpu_custom_call.1} parent=5 // pred_fallthru
        _
      %p1475 = scmp.le.s32.totalorder 2, %s21
      // Predicated region
      $region73: #{tpu_custom_call.1} parent=5 // pred_check
        %p1476 = pneg %p1475
      $region74: #{tpu_custom_call.1} parent=5 // pred_check_branch
        %1478 = sbr.rel (%p1476) target = $region76
      $region75: #{tpu_custom_call.1} parent=5 // pred_region
        %s1479 = ssub.s32 %s21, 2
        // Predicated region
        $region77: #{tpu_custom_call.1} parent=75 // pred_check
          %p1480 = pneg %p216
        $region78: #{tpu_custom_call.1} parent=75 // pred_check_branch
          %1482 = sbr.rel (%p1480) target = $region80
        $region79: #{tpu_custom_call.1} parent=75 // pred_region
          %s1483 = sand.u32 %s201, 1
          %s1484 = scalar_lea.sflag [#allocation9], %s1483
          %s1485 = sand.u32 %s201, 1
          %s1486 = smul.addr %s1485, 8
          %s1487 = scalar_lea.vmem [#allocation15], %s1486
          %1488 = dma.done %s1484, 128
        $region80: #{tpu_custom_call.1} parent=75 // pred_fallthru
          _
      $region76: #{tpu_custom_call.1} parent=5 // pred_fallthru
        _
    $region6: #{tpu_custom_call.1} parent=1 // loop_footer
      %s25 = sadd.s32 1, %s21
    $region7: #{tpu_custom_call.1} parent=1 // loop_footer_branch
      %20 = sbr.rel target = $region3
    $region8: #{tpu_custom_call.1} parent=1 // loop_exit
      _
    %1489 = vsyncpa [#allocation8], 1
    %s1490 = scalar_lea.sflag [#allocation8], 1
    %1491 = vsyncpa %s1490, 1
    %1492 = vsyncpa [#allocation11], 1
    %1493 = vsyncpa [#allocation14], 1
    %1494 = vsyncpa [#allocation9], 1
    %s1495 = scalar_lea.sflag [#allocation9], 1
    %1496 = vsyncpa %s1495, 1

</llo_original>
